<compile_context>
chip_gen: v7x
topology: tpu7x:2x2x1
jax: 0.10.0
libtpu: 0.0.40
codegen_flags: <defaults>
</compile_context>

<pallas_src>
import functools

import jax
import jax.numpy as jnp
from jax.experimental import pallas as pl
from jax.experimental.pallas import tpu as pltpu


def _round_up(x, m):
    return (x + m - 1) // m * m


# ----------------------------------------------------------------------------
# Kernel 1: one SAGEConv layer (+ ReLU), tiled over node rows (i) and the
#           aggregation reduction dimension (k).
# ----------------------------------------------------------------------------
def _sage_layer_kernel(a_ref, hk_ref, hi_ref, wcat_ref, b_ref, o_ref, acc_ref):
    k = pl.program_id(1)

    @pl.when(k == 0)
    def _():
        acc_ref[...] = jnp.zeros_like(acc_ref)

    # mean-neighbor aggregation: keep A (holds 1/deg reciprocals) and h in f32.
    acc_ref[...] += jnp.dot(a_ref[...], hk_ref[...],
                            preferred_element_type=jnp.float32)

    @pl.when(k == pl.num_programs(1) - 1)
    def _():
        # Fused PyG SAGEConv projection:
        #   lin_l(aggr) + lin_r(x) == concat([aggr, x], -1) @ concat([Wl, Wr], 0)
        # bf16 operands, f32 accumulation; bias add + ReLU stay in f32.
        feat = jnp.concatenate([acc_ref[...], hi_ref[...]], axis=-1)
        out = jnp.dot(feat.astype(jnp.bfloat16), wcat_ref[...],
                      preferred_element_type=jnp.float32) + b_ref[...]
        o_ref[...] = jnp.maximum(out, 0.0)                       # F.relu


def sage_layer(a, h, wcat_bf16, bias, *, tile=256):
    n, hin = h.shape
    hout = wcat_bf16.shape[1]
    tm = tk = tile
    grid = (n // tm, n // tk)

    flops = 2 * n * n * hin + 2 * n * (2 * hin) * hout
    bytes_accessed = (4 * n * n                     # A_norm tiles
                      + 4 * n * hin * (grid[0] + 1)  # h streamed per row tile + self
                      + 2 * 2 * hin * hout + 4 * hout
                      + 4 * n * hout)               # output h

    return pl.pallas_call(
        _sage_layer_kernel,
        out_shape=jax.ShapeDtypeStruct((n, hout), jnp.float32),
        grid_spec=pltpu.PrefetchScalarGridSpec(
            num_scalar_prefetch=0,
            grid=grid,
            in_specs=[
                pl.BlockSpec((tm, tk), lambda i, k: (i, k)),         # A tile
                pl.BlockSpec((tk, hin), lambda i, k: (k, 0)),        # h[k] neighbors
                pl.BlockSpec((tm, hin), lambda i, k: (i, 0)),        # h[i] self term
                pl.BlockSpec((2 * hin, hout), lambda i, k: (0, 0)),  # W_cat (pinned)
                pl.BlockSpec((1, hout), lambda i, k: (0, 0)),        # bias  (pinned)
            ],
            out_specs=pl.BlockSpec((tm, hout), lambda i, k: (i, 0)),
            scratch_shapes=[pltpu.VMEM((tm, hin), jnp.float32)],     # aggr accumulator
        ),
        compiler_params=pltpu.CompilerParams(
            # row tiles shard across both v7x TensorCores; reduction axis last.
            dimension_semantics=("parallel", "arbitrary"),
            # 256-tiles use <2 MiB; 32 MiB scoped limit is safe on v5e/v6e/v7x.
            vmem_limit_bytes=32 * 1024 * 1024,
        ),
        cost_estimate=pl.CostEstimate(flops=flops, transcendentals=0,
                                      bytes_accessed=bytes_accessed),
    )(a, h, h, wcat_bf16, bias)


# ----------------------------------------------------------------------------
# Kernel 2: global_mean_pool (P @ h, K-loop over node tiles) -> lin1 + ReLU ->
#           lin2 -> log_softmax.
# ----------------------------------------------------------------------------
def _head_kernel(p_ref, h_ref, w1_ref, b1_ref, w2_ref, b2_ref, o_ref, acc_ref):
    k = pl.program_id(0)

    @pl.when(k == 0)
    def _():
        acc_ref[...] = jnp.zeros_like(acc_ref)

    acc_ref[...] += jnp.dot(p_ref[...], h_ref[...],
                            preferred_element_type=jnp.float32)

    @pl.when(k == pl.num_programs(0) - 1)
    def _():
        z = jnp.dot(acc_ref[...].astype(jnp.bfloat16), w1_ref[...],
                    preferred_element_type=jnp.float32) + b1_ref[...]
        z = jnp.maximum(z, 0.0)                                   # lin1 + ReLU
        logits = jnp.dot(z.astype(jnp.bfloat16), w2_ref[...],
                         preferred_element_type=jnp.float32) + b2_ref[...]
        m = jnp.max(logits, axis=-1, keepdims=True)               # log_softmax
        lse = jnp.log(jnp.sum(jnp.exp(logits - m), axis=-1, keepdims=True)) + m
        # NOTE: output last dim = num_classes (< 128) -> masked stores; pad the
        # class dim to 128 if G/C ever grow beyond toy size.
        o_ref[...] = logits - lse


def pool_head(pmat, h, w1_bf16, b1, w2_bf16, b2, *, tile=256):
    g, n = pmat.shape
    hdim = h.shape[1]
    l = w1_bf16.shape[1]
    c = w2_bf16.shape[1]
    tk = tile
    grid = (n // tk,)

    flops = 2 * g * n * hdim + 2 * g * hdim * l + 2 * g * l * c
    bytes_accessed = (4 * g * n + 4 * n * hdim + 2 * hdim * l + 2 * l * c
                      + 4 * (l + c) + 4 * g * c)

    return pl.pallas_call(
        _head_kernel,
        out_shape=jax.ShapeDtypeStruct((g, c), jnp.float32),
        grid_spec=pltpu.PrefetchScalarGridSpec(
            num_scalar_prefetch=0,
            grid=grid,
            in_specs=[
                pl.BlockSpec((g, tk), lambda k: (0, k)),       # pool tile
                pl.BlockSpec((tk, hdim), lambda k: (k, 0)),    # h tile
                pl.BlockSpec((hdim, l), lambda k: (0, 0)),     # w1 (pinned)
                pl.BlockSpec((1, l), lambda k: (0, 0)),        # b1 (pinned)
                pl.BlockSpec((l, c), lambda k: (0, 0)),        # w2 (pinned)
                pl.BlockSpec((1, c), lambda k: (0, 0)),        # b2 (pinned)
            ],
            out_specs=pl.BlockSpec((g, c), lambda k: (0, 0)),
            scratch_shapes=[pltpu.VMEM((g, hdim), jnp.float32)],
        ),
        compiler_params=pltpu.CompilerParams(
            dimension_semantics=("arbitrary",),
            vmem_limit_bytes=32 * 1024 * 1024,
        ),
        cost_estimate=pl.CostEstimate(flops=flops, transcendentals=g * c,
                                      bytes_accessed=bytes_accessed),
    )(pmat, h, w1_bf16, b1, w2_bf16, b2)


# ----------------------------------------------------------------------------
# Wrapper: padding, weight fusion (W_cat) and bf16 casting, then 4 kernels.
# ----------------------------------------------------------------------------
@functools.partial(jax.jit, static_argnames=("tile",))
def graphsage0tpk_forward(x, a_norm, pool, params, *, tile=256):
    """Tiled Pallas forward of GraphSage0TPK (3x SAGEConv -> pool -> MLP head)."""
    n, f = x.shape
    g = pool.shape[0]
    hidden = params["wl1"].shape[1]

    # lane-dense feature padding + node padding to the tile multiple.
    f_pad = _round_up(f, 128)
    n_pad = _round_up(n, tile)
    x_p = jnp.zeros((n_pad, f_pad), jnp.float32).at[:n, :f].set(x)
    a_p = jnp.zeros((n_pad, n_pad), jnp.float32).at[:n, :n].set(a_norm)
    p_p = jnp.zeros((g, n_pad), jnp.float32).at[:, :n].set(pool)

    # Fused projection weights W_cat = concat([W_l, W_r], 0), cast once to bf16.
    wl1 = jnp.zeros((f_pad, hidden), jnp.float32).at[:f].set(params["wl1"])
    wr1 = jnp.zeros((f_pad, hidden), jnp.float32).at[:f].set(params["wr1"])
    wcat1 = jnp.concatenate([wl1, wr1], axis=0).astype(jnp.bfloat16)
    wcat2 = jnp.concatenate([params["wl2"], params["wr2"]], 0).astype(jnp.bfloat16)
    wcat3 = jnp.concatenate([params["wl3"], params["wr3"]], 0).astype(jnp.bfloat16)

    h = sage_layer(a_p, x_p, wcat1, params["bl1"], tile=tile)
    h = sage_layer(a_p, h, wcat2, params["bl2"], tile=tile)
    h = sage_layer(a_p, h, wcat3, params["bl3"], tile=tile)

    return pool_head(p_p, h,
                     params["w1"].astype(jnp.bfloat16), params["b1"],
                     params["w2"].astype(jnp.bfloat16), params["b2"],
                     tile=tile)


# ----------------------------------------------------------------------------
# Glue: parameter init, dense aggregation / pooling matrices, references.
# ----------------------------------------------------------------------------
def init_params(key, num_features, output_channels, hidden=128, lin_hidden=64):
    def lin(key, fan_in, fan_out, bias=True):
        kw, kb = jax.random.split(key)
        bound = 1.0 / jnp.sqrt(fan_in)
        w = jax.random.uniform(kw, (fan_in, fan_out), jnp.float32, -bound, bound)
        b = (jax.random.uniform(kb, (1, fan_out), jnp.float32, -bound, bound)
             if bias else None)
        return w, b

    keys = jax.random.split(key, 8)
    p = {}
    p["wl1"], p["bl1"] = lin(keys[0], num_features, hidden)
    p["wr1"], _        = lin(keys[1], num_features, hidden, bias=False)
    p["wl2"], p["bl2"] = lin(keys[2], hidden, hidden)
    p["wr2"], _        = lin(keys[3], hidden, hidden, bias=False)
    p["wl3"], p["bl3"] = lin(keys[4], hidden, hidden)
    p["wr3"], _        = lin(keys[5], hidden, hidden, bias=False)
    p["w1"], p["b1"]   = lin(keys[6], hidden, lin_hidden)
    p["w2"], p["b2"]   = lin(keys[7], lin_hidden, output_channels)
    return p


def build_aggregation_matrix(edge_index, num_nodes):
    # A_norm[i, j] = 1/deg_in(i) if edge j->i (mean aggregation of SAGEConv).
    src, dst = edge_index[0], edge_index[1]
    adj = jnp.zeros((num_nodes, num_nodes), jnp.float32).at[dst, src].add(1.0)
    deg = adj.sum(axis=1, keepdims=True)
    return jnp.where(deg > 0, adj / jnp.maximum(deg, 1.0), 0.0)


def build_pool_matrix(batch, num_graphs, num_nodes):
    onehot = (batch[None, :] == jnp.arange(num_graphs)[:, None]).astype(jnp.float32)
    cnt = onehot.sum(axis=1, keepdims=True)
    return onehot / jnp.maximum(cnt, 1.0)


def reference_forward(x, a_norm, pool, p, matmul_dtype=jnp.float32):
    """Pure-JAX reference. matmul_dtype=bfloat16 mirrors the kernel's precision
    policy (bf16 projection/head matmuls, f32 aggregation & elementwise)."""
    dt = matmul_dtype

    def mm(u, w):
        return jnp.dot(u.astype(dt), w.astype(dt),
                       preferred_element_type=jnp.float32)

    def sage(h, wl, bl, wr):
        aggr = jnp.dot(a_norm, h, preferred_element_type=jnp.float32)
        return jax.nn.relu(mm(aggr, wl) + bl + mm(h, wr))

    h = sage(x, p["wl1"], p["bl1"], p["wr1"])
    h = sage(h, p["wl2"], p["bl2"], p["wr2"])
    h = sage(h, p["wl3"], p["bl3"], p["wr3"])
    z = jnp.dot(pool, h, preferred_element_type=jnp.float32)
    z = jax.nn.relu(mm(z, p["w1"]) + p["b1"])
    return jax.nn.log_softmax(mm(z, p["w2"]) + p["b2"], axis=-1)


if __name__ == "__main__":
    key = jax.random.PRNGKey(0)
    k_x, k_e, k_g = jax.random.split(key, 3)

    # Small but grid-exercising problem: 8 graphs x 64 nodes = 512 nodes
    # -> sage grid (2, 2) with 256-tiles, head grid (2,).
    num_features = 16
    output_channels = 4
    num_graphs = 8
    nodes_per_graph = 64
    num_nodes = num_graphs * nodes_per_graph
    num_edges = 4096

    x = jax.random.normal(k_x, (num_nodes, num_features), jnp.float32)

    # random edges, kept within each graph's node range
    batch = jnp.repeat(jnp.arange(num_graphs), nodes_per_graph)
    e = jax.random.randint(k_e, (2, num_edges), 0, nodes_per_graph)
    graph_of_edge = jax.random.randint(k_g, (num_edges,), 0, num_graphs)
    edge_index = e + graph_of_edge[None, :] * nodes_per_graph

    a_norm = build_aggregation_matrix(edge_index, num_nodes)
    pool = build_pool_matrix(batch, num_graphs, num_nodes)
    params = init_params(jax.random.PRNGKey(42), num_features, output_channels)

    out = graphsage0tpk_forward(x, a_norm, pool, params)
    out = jax.block_until_ready(out)
    assert out.shape == (num_graphs, output_channels)

    # Tight check against a reference using the kernel's exact precision policy.
    ref_bf16 = reference_forward(x, a_norm, pool, params,
                                 matmul_dtype=jnp.bfloat16)
    assert jnp.allclose(out, ref_bf16, atol=5e-3, rtol=5e-3), (out, ref_bf16)

    # Loose sanity check against full-f32 math (bounds bf16 matmul drift).
    ref_f32 = reference_forward(x, a_norm, pool, params)
    assert jnp.allclose(out, ref_f32, atol=1e-1, rtol=1e-1), (out, ref_f32)

    print("KERNEL_OK")
</pallas_src>

<mosaic_0001>
module attributes {stable_mosaic.version = 11 : i64} {
  func.func @_sage_layer_kernel(%arg0: i32, %arg1: i32, %arg2: memref<256x256xf32, #tpu.memory_space<vmem>>, %arg3: memref<256x128xf32, #tpu.memory_space<vmem>>, %arg4: memref<256x128xf32, #tpu.memory_space<vmem>>, %arg5: memref<256x128xbf16, #tpu.memory_space<vmem>>, %arg6: memref<1x128xf32, #tpu.memory_space<vmem>>, %arg7: memref<256x128xf32, #tpu.memory_space<vmem>>, %arg8: memref<256x128xf32, #tpu.memory_space<vmem>>) attributes {dimension_semantics = [#tpu.dimension_semantics<parallel>, #tpu.dimension_semantics<arbitrary>], iteration_bounds = array<i64: 2, 2>, scalar_prefetch = 0 : i64, scratch_operands = 1 : i64, tpu.core_type = #tpu.core_type<tc>, window_params = [{transform_indices = @transform_0, window_bounds = array<i64: 256, 256>}, {transform_indices = @transform_1, window_bounds = array<i64: 256, 128>}, {transform_indices = @transform_2, window_bounds = array<i64: 256, 128>}, {pipeline_mode = #tpu.pipeline_mode<synchronous>, transform_indices = @transform_3, window_bounds = array<i64: 256, 128>}, {pipeline_mode = #tpu.pipeline_mode<synchronous>, transform_indices = @transform_4, window_bounds = array<i64: 1, 128>}, {transform_indices = @transform_5, window_bounds = array<i64: 256, 128>}]} {
    %c0_i32 = arith.constant 0 : i32
    %0 = arith.cmpi eq, %arg1, %c0_i32 : i32
    %1 = arith.extui %0 : i1 to i32
    %c0_i32_0 = arith.constant 0 : i32
    %2 = arith.cmpi ne, %1, %c0_i32_0 : i32
    scf.if %2 {
      %cst_9 = arith.constant 0.000000e+00 : f32
      %12 = vector.broadcast %cst_9 : f32 to vector<256x128xf32>
      %c0_10 = arith.constant 0 : index
      %c0_11 = arith.constant 0 : index
      %13 = vector.load %arg8[%c0_10, %c0_11] : memref<256x128xf32, #tpu.memory_space<vmem>>, vector<256x128xf32>
      tpu.vector_store %arg8[%c0_10, %c0_11], %12 {strides = array<i32>} : memref<256x128xf32, #tpu.memory_space<vmem>>, vector<256x128xf32>,
    } else {
    }
    %c0 = arith.constant 0 : index
    %c0_1 = arith.constant 0 : index
    %3 = vector.load %arg8[%c0, %c0_1] : memref<256x128xf32, #tpu.memory_space<vmem>>, vector<256x128xf32>
    %c0_2 = arith.constant 0 : index
    %c0_3 = arith.constant 0 : index
    %4 = vector.load %arg2[%c0_2, %c0_3] : memref<256x256xf32, #tpu.memory_space<vmem>>, vector<256x256xf32>
    %c0_4 = arith.constant 0 : index
    %c0_5 = arith.constant 0 : index
    %5 = vector.load %arg3[%c0_4, %c0_5] : memref<256x128xf32, #tpu.memory_space<vmem>>, vector<256x128xf32>
    %cst = arith.constant dense<0.000000e+00> : vector<256x128xf32>
    %6 = tpu.matmul %4, %5, %cst {dimension_numbers = #tpu.dot_dimension_numbers<[1], [0], [0], [1], [0, 0, 1, 1], [], []>} : vector<256x256xf32>, vector<256x128xf32>, vector<256x128xf32> -> vector<256x128xf32>
    %7 = arith.addf %3, %6 : vector<256x128xf32>
    %c0_6 = arith.constant 0 : index
    %c0_7 = arith.constant 0 : index
    %8 = vector.load %arg8[%c0_6, %c0_7] : memref<256x128xf32, #tpu.memory_space<vmem>>, vector<256x128xf32>
    tpu.vector_store %arg8[%c0_6, %c0_7], %7 {strides = array<i32>} : memref<256x128xf32, #tpu.memory_space<vmem>>, vector<256x128xf32>,
    %c1_i32 = arith.constant 1 : i32
    %9 = arith.cmpi eq, %arg1, %c1_i32 : i32
    %10 = arith.extui %9 : i1 to i32
    %c0_i32_8 = arith.constant 0 : i32
    %11 = arith.cmpi ne, %10, %c0_i32_8 : i32
    scf.if %11 {
      %c0_9 = arith.constant 0 : index
      %c0_10 = arith.constant 0 : index
      %12 = vector.load %arg8[%c0_9, %c0_10] : memref<256x128xf32, #tpu.memory_space<vmem>>, vector<256x128xf32>
      %c0_11 = arith.constant 0 : index
      %c0_12 = arith.constant 0 : index
      %13 = vector.load %arg4[%c0_11, %c0_12] : memref<256x128xf32, #tpu.memory_space<vmem>>, vector<256x128xf32>
      %14 = tpu.concatenate %12, %13 in 1 : vector<256x128xf32>, vector<256x128xf32> -> vector<256x256xf32>
      %15 = arith.truncf %14 : vector<256x256xf32> to vector<256x256xbf16>
      %c0_13 = arith.constant 0 : index
      %c0_14 = arith.constant 0 : index
      %16 = vector.load %arg5[%c0_13, %c0_14] : memref<256x128xbf16, #tpu.memory_space<vmem>>, vector<256x128xbf16>
      %cst_15 = arith.constant dense<0.000000e+00> : vector<256x128xf32>
      %17 = tpu.matmul %15, %16, %cst_15 {dimension_numbers = #tpu.dot_dimension_numbers<[1], [0], [0], [1], [0, 0, 1, 1], [], []>} : vector<256x256xbf16>, vector<256x128xbf16>, vector<256x128xf32> -> vector<256x128xf32>
      %c0_16 = arith.constant 0 : index
      %c0_17 = arith.constant 0 : index
      %18 = vector.load %arg6[%c0_16, %c0_17] : memref<1x128xf32, #tpu.memory_space<vmem>>, vector<1x128xf32>
      %19 = vector.broadcast %18 : vector<1x128xf32> to vector<256x128xf32>
      %20 = arith.addf %17, %19 : vector<256x128xf32>
      %cst_18 = arith.constant 0.000000e+00 : f32
      %21 = vector.broadcast %cst_18 : f32 to vector<256x128xf32>
      %22 = arith.maximumf %20, %21 : vector<256x128xf32>
      %c0_19 = arith.constant 0 : index
      %c0_20 = arith.constant 0 : index
      %23 = vector.load %arg7[%c0_19, %c0_20] : memref<256x128xf32, #tpu.memory_space<vmem>>, vector<256x128xf32>
      tpu.vector_store %arg7[%c0_19, %c0_20], %22 {strides = array<i32>} : memref<256x128xf32, #tpu.memory_space<vmem>>, vector<256x128xf32>,
    } else {
    }
    return
  }
  func.func @transform_0(%arg0: i32, %arg1: i32) -> (i32, i32) {
    %c0_i32 = arith.constant 0 : i32
    return %arg0, %arg1 : i32, i32
  }
  func.func @transform_1(%arg0: i32, %arg1: i32) -> (i32, i32) {
    %c0_i32 = arith.constant 0 : i32
    %c0_i32_0 = arith.constant 0 : i32
    return %arg1, %c0_i32 : i32, i32
  }
  func.func @transform_2(%arg0: i32, %arg1: i32) -> (i32, i32) {
    %c0_i32 = arith.constant 0 : i32
    %c0_i32_0 = arith.constant 0 : i32
    return %arg0, %c0_i32 : i32, i32
  }
  func.func @transform_3(%arg0: i32, %arg1: i32) -> (i32, i32) {
    %c0_i32 = arith.constant 0 : i32
    %c0_i32_0 = arith.constant 0 : i32
    %c0_i32_1 = arith.constant 0 : i32
    return %c0_i32, %c0_i32_0 : i32, i32
  }
  func.func @transform_4(%arg0: i32, %arg1: i32) -> (i32, i32) {
    %c0_i32 = arith.constant 0 : i32
    %c0_i32_0 = arith.constant 0 : i32
    %c0_i32_1 = arith.constant 0 : i32
    return %c0_i32, %c0_i32_0 : i32, i32
  }
  func.func @transform_5(%arg0: i32, %arg1: i32) -> (i32, i32) {
    %c0_i32 = arith.constant 0 : i32
    %c0_i32_0 = arith.constant 0 : i32
    return %arg0, %c0_i32 : i32, i32
  }
}

module attributes {stable_mosaic.version = 11 : i64} {
  func.func @_head_kernel(%arg0: i32, %arg1: memref<8x256xf32, #tpu.memory_space<vmem>>, %arg2: memref<256x128xf32, #tpu.memory_space<vmem>>, %arg3: memref<128x64xbf16, #tpu.memory_space<vmem>>, %arg4: memref<1x64xf32, #tpu.memory_space<vmem>>, %arg5: memref<64x4xbf16, #tpu.memory_space<vmem>>, %arg6: memref<1x4xf32, #tpu.memory_space<vmem>>, %arg7: memref<8x4xf32, #tpu.memory_space<vmem>>, %arg8: memref<8x128xf32, #tpu.memory_space<vmem>>) attributes {dimension_semantics = [#tpu.dimension_semantics<arbitrary>], iteration_bounds = array<i64: 2>, scalar_prefetch = 0 : i64, scratch_operands = 1 : i64, tpu.core_type = #tpu.core_type<tc>, window_params = [{transform_indices = @transform_0, window_bounds = array<i64: 8, 256>}, {transform_indices = @transform_1, window_bounds = array<i64: 256, 128>}, {pipeline_mode = #tpu.pipeline_mode<synchronous>, transform_indices = @transform_2, window_bounds = array<i64: 128, 64>}, {pipeline_mode = #tpu.pipeline_mode<synchronous>, transform_indices = @transform_3, window_bounds = array<i64: 1, 64>}, {pipeline_mode = #tpu.pipeline_mode<synchronous>, transform_indices = @transform_4, window_bounds = array<i64: 64, 4>}, {pipeline_mode = #tpu.pipeline_mode<synchronous>, transform_indices = @transform_5, window_bounds = array<i64: 1, 4>}, {pipeline_mode = #tpu.pipeline_mode<synchronous>, transform_indices = @transform_6, window_bounds = array<i64: 8, 4>}]} {
    %c0_i32 = arith.constant 0 : i32
    %0 = arith.cmpi eq, %arg0, %c0_i32 : i32
    %1 = arith.extui %0 : i1 to i32
    %c0_i32_0 = arith.constant 0 : i32
    %2 = arith.cmpi ne, %1, %c0_i32_0 : i32
    scf.if %2 {
      %cst_9 = arith.constant 0.000000e+00 : f32
      %12 = vector.broadcast %cst_9 : f32 to vector<8x128xf32>
      %c0_10 = arith.constant 0 : index
      %c0_11 = arith.constant 0 : index
      %13 = vector.load %arg8[%c0_10, %c0_11] : memref<8x128xf32, #tpu.memory_space<vmem>>, vector<8x128xf32>
      tpu.vector_store %arg8[%c0_10, %c0_11], %12 {strides = array<i32>} : memref<8x128xf32, #tpu.memory_space<vmem>>, vector<8x128xf32>,
    } else {
    }
    %c0 = arith.constant 0 : index
    %c0_1 = arith.constant 0 : index
    %3 = vector.load %arg8[%c0, %c0_1] : memref<8x128xf32, #tpu.memory_space<vmem>>, vector<8x128xf32>
    %c0_2 = arith.constant 0 : index
    %c0_3 = arith.constant 0 : index
    %4 = vector.load %arg1[%c0_2, %c0_3] : memref<8x256xf32, #tpu.memory_space<vmem>>, vector<8x256xf32>
    %c0_4 = arith.constant 0 : index
    %c0_5 = arith.constant 0 : index
    %5 = vector.load %arg2[%c0_4, %c0_5] : memref<256x128xf32, #tpu.memory_space<vmem>>, vector<256x128xf32>
    %cst = arith.constant dense<0.000000e+00> : vector<8x128xf32>
    %6 = tpu.matmul %4, %5, %cst {dimension_numbers = #tpu.dot_dimension_numbers<[1], [0], [0], [1], [0, 0, 1, 1], [], []>} : vector<8x256xf32>, vector<256x128xf32>, vector<8x128xf32> -> vector<8x128xf32>
    %7 = arith.addf %3, %6 : vector<8x128xf32>
    %c0_6 = arith.constant 0 : index
    %c0_7 = arith.constant 0 : index
    %8 = vector.load %arg8[%c0_6, %c0_7] : memref<8x128xf32, #tpu.memory_space<vmem>>, vector<8x128xf32>
    tpu.vector_store %arg8[%c0_6, %c0_7], %7 {strides = array<i32>} : memref<8x128xf32, #tpu.memory_space<vmem>>, vector<8x128xf32>,
    %c1_i32 = arith.constant 1 : i32
    %9 = arith.cmpi eq, %arg0, %c1_i32 : i32
    %10 = arith.extui %9 : i1 to i32
    %c0_i32_8 = arith.constant 0 : i32
    %11 = arith.cmpi ne, %10, %c0_i32_8 : i32
    scf.if %11 {
      %c0_9 = arith.constant 0 : index
      %c0_10 = arith.constant 0 : index
      %12 = vector.load %arg8[%c0_9, %c0_10] : memref<8x128xf32, #tpu.memory_space<vmem>>, vector<8x128xf32>
      %13 = arith.truncf %12 : vector<8x128xf32> to vector<8x128xbf16>
      %c0_11 = arith.constant 0 : index
      %c0_12 = arith.constant 0 : index
      %14 = vector.load %arg3[%c0_11, %c0_12] : memref<128x64xbf16, #tpu.memory_space<vmem>>, vector<128x64xbf16>
      %cst_13 = arith.constant dense<0.000000e+00> : vector<8x64xf32>
      %15 = tpu.matmul %13, %14, %cst_13 {dimension_numbers = #tpu.dot_dimension_numbers<[1], [0], [0], [1], [0, 0, 1, 1], [], []>} : vector<8x128xbf16>, vector<128x64xbf16>, vector<8x64xf32> -> vector<8x64xf32>
      %c0_14 = arith.constant 0 : index
      %c0_15 = arith.constant 0 : index
      %16 = vector.load %arg4[%c0_14, %c0_15] : memref<1x64xf32, #tpu.memory_space<vmem>>, vector<1x64xf32>
      %17 = vector.broadcast %16 : vector<1x64xf32> to vector<8x64xf32>
      %18 = arith.addf %15, %17 : vector<8x64xf32>
      %cst_16 = arith.constant 0.000000e+00 : f32
      %19 = vector.broadcast %cst_16 : f32 to vector<8x64xf32>
      %20 = arith.maximumf %18, %19 : vector<8x64xf32>
      %21 = arith.truncf %20 : vector<8x64xf32> to vector<8x64xbf16>
      %c0_17 = arith.constant 0 : index
      %c0_18 = arith.constant 0 : index
      %22 = vector.load %arg5[%c0_17, %c0_18] : memref<64x4xbf16, #tpu.memory_space<vmem>>, vector<64x4xbf16>
      %cst_19 = arith.constant dense<0.000000e+00> : vector<8x4xf32>
      %23 = tpu.matmul %21, %22, %cst_19 {dimension_numbers = #tpu.dot_dimension_numbers<[1], [0], [0], [1], [0, 0, 1, 1], [], []>} : vector<8x64xbf16>, vector<64x4xbf16>, vector<8x4xf32> -> vector<8x4xf32>
      %c0_20 = arith.constant 0 : index
      %c0_21 = arith.constant 0 : index
      %24 = vector.load %arg6[%c0_20, %c0_21] : memref<1x4xf32, #tpu.memory_space<vmem>>, vector<1x4xf32>
      %25 = vector.broadcast %24 : vector<1x4xf32> to vector<8x4xf32>
      %26 = arith.addf %23, %25 : vector<8x4xf32>
      %cst_22 = arith.constant dense<0xFF800000> : vector<8xf32>
      %27 = vector.multi_reduction <maximumf>, %26, %cst_22 [1] : vector<8x4xf32> to vector<8xf32>
      %28 = vector.shape_cast %27 : vector<8xf32> to vector<8x1xf32>
      %29 = vector.broadcast %28 : vector<8x1xf32> to vector<8x4xf32>
      %30 = arith.subf %26, %29 : vector<8x4xf32>
      %31 = math.exp %30 : vector<8x4xf32>
      %cst_23 = arith.constant dense<0.000000e+00> : vector<8xf32>
      %32 = vector.multi_reduction <add>, %31, %cst_23 [1] : vector<8x4xf32> to vector<8xf32>
      %33 = vector.shape_cast %32 : vector<8xf32> to vector<8x1xf32>
      %34 = math.log %33 : vector<8x1xf32>
      %35 = arith.addf %34, %28 : vector<8x1xf32>
      %36 = vector.broadcast %35 : vector<8x1xf32> to vector<8x4xf32>
      %37 = arith.subf %26, %36 : vector<8x4xf32>
      %c0_24 = arith.constant 0 : index
      %c0_25 = arith.constant 0 : index
      %38 = vector.load %arg7[%c0_24, %c0_25] : memref<8x4xf32, #tpu.memory_space<vmem>>, vector<8x4xf32>
      tpu.vector_store %arg7[%c0_24, %c0_25], %37 {strides = array<i32>} : memref<8x4xf32, #tpu.memory_space<vmem>>, vector<8x4xf32>,
    } else {
    }
    return
  }
  func.func @transform_0(%arg0: i32) -> (i32, i32) {
    %c0_i32 = arith.constant 0 : i32
    %c0_i32_0 = arith.constant 0 : i32
    return %c0_i32, %arg0 : i32, i32
  }
  func.func @transform_1(%arg0: i32) -> (i32, i32) {
    %c0_i32 = arith.constant 0 : i32
    %c0_i32_0 = arith.constant 0 : i32
    return %arg0, %c0_i32 : i32, i32
  }
  func.func @transform_2(%arg0: i32) -> (i32, i32) {
    %c0_i32 = arith.constant 0 : i32
    %c0_i32_0 = arith.constant 0 : i32
    %c0_i32_1 = arith.constant 0 : i32
    return %c0_i32, %c0_i32_0 : i32, i32
  }
  func.func @transform_3(%arg0: i32) -> (i32, i32) {
    %c0_i32 = arith.constant 0 : i32
    %c0_i32_0 = arith.constant 0 : i32
    %c0_i32_1 = arith.constant 0 : i32
    return %c0_i32, %c0_i32_0 : i32, i32
  }
  func.func @transform_4(%arg0: i32) -> (i32, i32) {
    %c0_i32 = arith.constant 0 : i32
    %c0_i32_0 = arith.constant 0 : i32
    %c0_i32_1 = arith.constant 0 : i32
    return %c0_i32, %c0_i32_0 : i32, i32
  }
  func.func @transform_5(%arg0: i32) -> (i32, i32) {
    %c0_i32 = arith.constant 0 : i32
    %c0_i32_0 = arith.constant 0 : i32
    %c0_i32_1 = arith.constant 0 : i32
    return %c0_i32, %c0_i32_0 : i32, i32
  }
  func.func @transform_6(%arg0: i32) -> (i32, i32) {
    %c0_i32 = arith.constant 0 : i32
    %c0_i32_0 = arith.constant 0 : i32
    %c0_i32_1 = arith.constant 0 : i32
    return %c0_i32, %c0_i32_0 : i32, i32
  }
}

</mosaic_0001>

<llo_original>
// kernel: graphsage0tpk_forward.7
$region0: #{graphsage0tpk_forward.7}
  #allocation0 [shape = 'u32[]', space=smem, size = 0x4, offset = 0x4, fixed_abs, tag = 'smem constant byte address 0x4 - core index']
  #allocation1 [shape = 'u32[144,128]{1,0:T(1,128)}', space=vmem, size = 0x12000, scoped, tag = 'internal scratch']
  #allocation2 [shape = 'f32[8,128]{1,0:T(8,128)}', space=vmem, size = 0x1000, scoped, tag = 'scratch operand']
  %s0 = inlined_call_operand.vmem [shape: f32[8,512], index: 0, kind: input, shape index: {}]
  %s1 = inlined_call_operand.vmem [shape: f32[512,128], index: 1, kind: input, shape index: {}]
  %s2 = inlined_call_operand.vmem [shape: bf16[128,64], index: 2, kind: input, shape index: {}]
  %s3 = inlined_call_operand.vmem [shape: f32[1,64], index: 3, kind: input, shape index: {}]
  %s4 = inlined_call_operand.vmem [shape: bf16[64,4], index: 4, kind: input, shape index: {}]
  %s5 = inlined_call_operand.vmem [shape: f32[1,4], index: 5, kind: input, shape index: {}]
  %s6 = inlined_call_operand.vmem [shape: f32[8,4], index: 6, kind: output, shape index: {}]
  %s7 = sld [smem:[#allocation0]]
  $region65: #{graphsage0tpk_forward.7} parent=0
    _
  %s9 = ssub.s32 1, %s7
  %s10 = scalar_select 0, %s9, %s7
  loop: start=0, step=1, limit=4
  $region2: #{graphsage0tpk_forward.7} parent=0 // loop_pre_header
    _
  $region3: #{graphsage0tpk_forward.7} parent=0 // loop_header
    %s12 = sphi 0, %s16
    %p13 = scmp.ge.s32.totalorder %s12, 4
    %s22 = sphi 0, %s24
    %s25 = sphi 0, %s22
    %s26 = sphi 0, %s25
    %s42 = sphi 0, %s26
    %s48 = sphi 0, %s50
    %s51 = sphi 0, %s48
    %s52 = sphi 0, %s51
    %s68 = sphi 0, %s52
    %s72 = sphi 0, %s72
    %s74 = sphi 0, %s72
    %s75 = sphi 0, %s74
    %s89 = sphi 0, %s75
    %s93 = sphi 0, %s93
    %s95 = sphi 0, %s93
    %s96 = sphi 0, %s95
    %s110 = sphi 0, %s96
    %s114 = sphi 0, %s114
    %s116 = sphi 0, %s114
    %s117 = sphi 0, %s116
    %s131 = sphi 0, %s117
    %s135 = sphi 0, %s135
    %s137 = sphi 0, %s135
    %s138 = sphi 0, %s137
    %s152 = sphi 0, %s138
    %s156 = sphi 0, %s156
    %s158 = sphi 0, %s156
    %s159 = sphi 0, %s158
    %s173 = sphi 0, %s159
  $region4: #{graphsage0tpk_forward.7} parent=0 // loop_header_branch
    %15 = sbr.rel (%p13) target = $region8
  $region5: #{graphsage0tpk_forward.7} parent=0 // loop_body
    %s17 = ssub.s32 %s12, 1
    %s18 = ssub.s32 %s12, 2
    %s19 = sadd.s32 %s12, 1
    %s20 = ssub.s32 %s12, %s19
    %p21 = scmp.eq.s32.totalorder %s20, 0
    %s23 = sadd.s32 %s22, 1
    %s24 = scalar_select %p21, %s22, %s23
    %p27 = pneg %p21
    %p28 = scmp.eq.s32.totalorder %s12, 1
    %p29 = por %p27, %p28
    %p30 = scmp.ne.s32.totalorder %s22, %s25
    %p31 = scmp.eq.s32.totalorder %s12, 0
    %p32 = por %p30, %p31
    %p33 = scmp.ne.s32.totalorder %s22, %s25
    %p34 = scmp.eq.s32.totalorder %s17, 1
    %p35 = por %p33, %p34
    %p36 = scmp.ne.s32.totalorder %s25, %s26
    %p37 = scmp.eq.s32.totalorder %s17, 0
    %p38 = por %p36, %p37
    %p39 = scmp.ne.s32.totalorder %s25, %s26
    %p40 = scmp.eq.s32.totalorder %s18, 1
    %p41 = por %p39, %p40
    %p43 = scmp.ne.s32.totalorder %s26, %s42
    %p44 = scmp.eq.s32.totalorder %s18, 0
    %p45 = por %p43, %p44
    %s46 = ssub.s32 %s12, %s19
    %p47 = scmp.eq.s32.totalorder %s46, 0
    %s49 = sadd.s32 %s48, 1
    %s50 = scalar_select %p47, %s48, %s49
    %p53 = pneg %p47
    %p54 = scmp.eq.s32.totalorder %s12, 1
    %p55 = por %p53, %p54
    %p56 = scmp.ne.s32.totalorder %s48, %s51
    %p57 = scmp.eq.s32.totalorder %s12, 0
    %p58 = por %p56, %p57
    %p59 = scmp.ne.s32.totalorder %s48, %s51
    %p60 = scmp.eq.s32.totalorder %s17, 1
    %p61 = por %p59, %p60
    %p62 = scmp.ne.s32.totalorder %s51, %s52
    %p63 = scmp.eq.s32.totalorder %s17, 0
    %p64 = por %p62, %p63
    %p65 = scmp.ne.s32.totalorder %s51, %s52
    %p66 = scmp.eq.s32.totalorder %s18, 1
    %p67 = por %p65, %p66
    %p69 = scmp.ne.s32.totalorder %s52, %s68
    %p70 = scmp.eq.s32.totalorder %s18, 0
    %p71 = por %p69, %p70
    %s73 = sadd.s32 %s72, 1
    %p76 = scmp.eq.s32.totalorder %s12, 1
    %p77 = scmp.ne.s32.totalorder %s72, %s74
    %p78 = scmp.eq.s32.totalorder %s12, 0
    %p79 = por %p77, %p78
    %p80 = scmp.ne.s32.totalorder %s72, %s74
    %p81 = scmp.eq.s32.totalorder %s17, 1
    %p82 = por %p80, %p81
    %p83 = scmp.ne.s32.totalorder %s74, %s75
    %p84 = scmp.eq.s32.totalorder %s17, 0
    %p85 = por %p83, %p84
    %p86 = scmp.ne.s32.totalorder %s74, %s75
    %p87 = scmp.eq.s32.totalorder %s18, 1
    %p88 = por %p86, %p87
    %p90 = scmp.ne.s32.totalorder %s75, %s89
    %p91 = scmp.eq.s32.totalorder %s18, 0
    %p92 = por %p90, %p91
    %s94 = sadd.s32 %s93, 1
    %p97 = scmp.eq.s32.totalorder %s12, 1
    %p98 = scmp.ne.s32.totalorder %s93, %s95
    %p99 = scmp.eq.s32.totalorder %s12, 0
    %p100 = por %p98, %p99
    %p101 = scmp.ne.s32.totalorder %s93, %s95
    %p102 = scmp.eq.s32.totalorder %s17, 1
    %p103 = por %p101, %p102
    %p104 = scmp.ne.s32.totalorder %s95, %s96
    %p105 = scmp.eq.s32.totalorder %s17, 0
    %p106 = por %p104, %p105
    %p107 = scmp.ne.s32.totalorder %s95, %s96
    %p108 = scmp.eq.s32.totalorder %s18, 1
    %p109 = por %p107, %p108
    %p111 = scmp.ne.s32.totalorder %s96, %s110
    %p112 = scmp.eq.s32.totalorder %s18, 0
    %p113 = por %p111, %p112
    %s115 = sadd.s32 %s114, 1
    %p118 = scmp.eq.s32.totalorder %s12, 1
    %p119 = scmp.ne.s32.totalorder %s114, %s116
    %p120 = scmp.eq.s32.totalorder %s12, 0
    %p121 = por %p119, %p120
    %p122 = scmp.ne.s32.totalorder %s114, %s116
    %p123 = scmp.eq.s32.totalorder %s17, 1
    %p124 = por %p122, %p123
    %p125 = scmp.ne.s32.totalorder %s116, %s117
    %p126 = scmp.eq.s32.totalorder %s17, 0
    %p127 = por %p125, %p126
    %p128 = scmp.ne.s32.totalorder %s116, %s117
    %p129 = scmp.eq.s32.totalorder %s18, 1
    %p130 = por %p128, %p129
    %p132 = scmp.ne.s32.totalorder %s117, %s131
    %p133 = scmp.eq.s32.totalorder %s18, 0
    %p134 = por %p132, %p133
    %s136 = sadd.s32 %s135, 1
    %p139 = scmp.eq.s32.totalorder %s12, 1
    %p140 = scmp.ne.s32.totalorder %s135, %s137
    %p141 = scmp.eq.s32.totalorder %s12, 0
    %p142 = por %p140, %p141
    %p143 = scmp.ne.s32.totalorder %s135, %s137
    %p144 = scmp.eq.s32.totalorder %s17, 1
    %p145 = por %p143, %p144
    %p146 = scmp.ne.s32.totalorder %s137, %s138
    %p147 = scmp.eq.s32.totalorder %s17, 0
    %p148 = por %p146, %p147
    %p149 = scmp.ne.s32.totalorder %s137, %s138
    %p150 = scmp.eq.s32.totalorder %s18, 1
    %p151 = por %p149, %p150
    %p153 = scmp.ne.s32.totalorder %s138, %s152
    %p154 = scmp.eq.s32.totalorder %s18, 0
    %p155 = por %p153, %p154
    %s157 = sadd.s32 %s156, 1
    %p160 = scmp.eq.s32.totalorder %s12, 1
    %p161 = scmp.ne.s32.totalorder %s156, %s158
    %p162 = scmp.eq.s32.totalorder %s12, 0
    %p163 = por %p161, %p162
    %p164 = scmp.ne.s32.totalorder %s156, %s158
    %p165 = scmp.eq.s32.totalorder %s17, 1
    %p166 = por %p164, %p165
    %p167 = scmp.ne.s32.totalorder %s158, %s159
    %p168 = scmp.eq.s32.totalorder %s17, 0
    %p169 = por %p167, %p168
    %p170 = scmp.ne.s32.totalorder %s158, %s159
    %p171 = scmp.eq.s32.totalorder %s18, 1
    %p172 = por %p170, %p171
    %p174 = scmp.ne.s32.totalorder %s159, %s173
    %p175 = scmp.eq.s32.totalorder %s18, 0
    %p176 = por %p174, %p175
    %p177 = scmp.le.s32.totalorder 1, %s12
    %p178 = scmp.lt.s32.totalorder %s12, 3
    %p179 = pnand %p177, %p178
    %p180 = pneg %p179
    // Predicated region
    $region9: #{graphsage0tpk_forward.7} parent=5 // pred_check
      _
    $region10: #{graphsage0tpk_forward.7} parent=5 // pred_check_branch
      %182 = sbr.rel (%p179) target = $region12
    $region11: #{graphsage0tpk_forward.7} parent=5 // pred_region
      %s183 = ssub.s32 %s12, 1
      // Predicated region
      $region13: #{graphsage0tpk_forward.7} parent=11 // pred_check
        %p184 = pneg %p85
      $region14: #{graphsage0tpk_forward.7} parent=11 // pred_check_branch
        %186 = sbr.rel (%p184) target = $region16
      $region15: #{graphsage0tpk_forward.7} parent=11 // pred_region
        _
      $region16: #{graphsage0tpk_forward.7} parent=11 // pred_fallthru
        _
      // Predicated region
      $region17: #{graphsage0tpk_forward.7} parent=11 // pred_check
        %p187 = pneg %p106
      $region18: #{graphsage0tpk_forward.7} parent=11 // pred_check_branch
        %189 = sbr.rel (%p187) target = $region20
      $region19: #{graphsage0tpk_forward.7} parent=11 // pred_region
        _
      $region20: #{graphsage0tpk_forward.7} parent=11 // pred_fallthru
        _
      // Predicated region
      $region21: #{graphsage0tpk_forward.7} parent=11 // pred_check
        %p190 = pneg %p127
      $region22: #{graphsage0tpk_forward.7} parent=11 // pred_check_branch
        %192 = sbr.rel (%p190) target = $region24
      $region23: #{graphsage0tpk_forward.7} parent=11 // pred_region
        _
      $region24: #{graphsage0tpk_forward.7} parent=11 // pred_fallthru
        _
      // Predicated region
      $region25: #{graphsage0tpk_forward.7} parent=11 // pred_check
        %p193 = pneg %p148
      $region26: #{graphsage0tpk_forward.7} parent=11 // pred_check_branch
        %195 = sbr.rel (%p193) target = $region28
      $region27: #{graphsage0tpk_forward.7} parent=11 // pred_region
        _
      $region28: #{graphsage0tpk_forward.7} parent=11 // pred_fallthru
        _
    $region12: #{graphsage0tpk_forward.7} parent=5 // pred_fallthru
      _
    %p196 = scmp.lt.s32.totalorder %s12, 2
    // Predicated region
    $region29: #{graphsage0tpk_forward.7} parent=5 // pred_check
      %p197 = pneg %p196
    $region30: #{graphsage0tpk_forward.7} parent=5 // pred_check_branch
      %199 = sbr.rel (%p197) target = $region32
    $region31: #{graphsage0tpk_forward.7} parent=5 // pred_region
      // Predicated region
      $region33: #{graphsage0tpk_forward.7} parent=31 // pred_check
        %p200 = pneg %p32
      $region34: #{graphsage0tpk_forward.7} parent=31 // pred_check_branch
        %202 = sbr.rel (%p200) target = $region36
      $region35: #{graphsage0tpk_forward.7} parent=31 // pred_region
        %s203 = smul.u32 2, %s12
        %p204 = scmp.lt.s32.totalorder %s203, 3
        %s205 = scalar_select %p204, %s203, 3
        %s206 = smul.addr %s205, 8
        %s207 = scalar_lea.vmem %s0, %s206
        %s208 = smul.u32 2, %s12
      $region36: #{graphsage0tpk_forward.7} parent=31 // pred_fallthru
        _
      // Predicated region
      $region37: #{graphsage0tpk_forward.7} parent=31 // pred_check
        %p209 = pneg %p58
      $region38: #{graphsage0tpk_forward.7} parent=31 // pred_check_branch
        %211 = sbr.rel (%p209) target = $region40
      $region39: #{graphsage0tpk_forward.7} parent=31 // pred_region
        %s212 = smul.u32 32, %s12
        %p213 = scmp.lt.s32.totalorder %s212, 63
        %s214 = scalar_select %p213, %s212, 63
        %s215 = smul.addr %s214, 8
        %s216 = scalar_lea.vmem %s1, %s215
        %s217 = smul.u32 32, %s12
      $region40: #{graphsage0tpk_forward.7} parent=31 // pred_fallthru
        _
    $region32: #{graphsage0tpk_forward.7} parent=5 // pred_fallthru
      _
    %p218 = scmp.le.s32.totalorder 1, %s12
    %p219 = scmp.lt.s32.totalorder %s12, 3
    %p220 = pnand %p218, %p219
    %p221 = pneg %p220
    // Predicated region
    $region41: #{graphsage0tpk_forward.7} parent=5 // pred_check
      _
    $region42: #{graphsage0tpk_forward.7} parent=5 // pred_check_branch
      %223 = sbr.rel (%p220) target = $region44
    $region43: #{graphsage0tpk_forward.7} parent=5 // pred_region
      %s224 = ssub.s32 %s12, 1
      %s225 = smul.u32 2, %s17
      %p226 = scmp.lt.s32.totalorder %s225, 3
      %s227 = scalar_select %p226, %s225, 3
      %s228 = smul.addr %s227, 8
      %s229 = scalar_lea.vmem %s0, %s228
      %p230 = pneg %p38
      %p231 = pneg %p35
      %s232 = smul.u32 32, %s17
      %p233 = scmp.lt.s32.totalorder %s232, 63
      %s234 = scalar_select %p233, %s232, 63
      %s235 = smul.addr %s234, 8
      %s236 = scalar_lea.vmem %s1, %s235
      %p237 = pneg %p64
      %p238 = pneg %p61
      %p239 = pneg %p85
      %p240 = pneg %p82
      %p241 = pneg %p106
      %p242 = pneg %p103
      %p243 = pneg %p127
      %p244 = pneg %p124
      %p245 = pneg %p148
      %p246 = pneg %p145
      %p247 = pneg %p169
      %p248 = pneg %p166
      %s249 = smul.u32 2, %s17
      %p250 = scmp.lt.s32.totalorder %s249, 3
      %s251 = scalar_select %p250, %s249, 3
      %s252 = smul.addr %s251, 8
      %s253 = scalar_lea.vmem %s0, %s252
      %s254 = smul.u32 2, %s17
      %s255 = smul.u32 32, %s17
      %p256 = scmp.lt.s32.totalorder %s255, 63
      %s257 = scalar_select %p256, %s255, 63
      %s258 = smul.addr %s257, 8
      %s259 = scalar_lea.vmem %s1, %s258
      %s260 = smul.u32 32, %s17
      %p262 = scmp.eq.s32.totalorder %s17, 0
      // Predicated region
      $region45: #{graphsage0tpk_forward.7} parent=43 // pred_check
        %p263 = pneg %p262
      $region46: #{graphsage0tpk_forward.7} parent=43 // pred_check_branch
        %265 = sbr.rel (%p263) target = $region48
      $region47: #{graphsage0tpk_forward.7} parent=43 // pred_region
        %266 = vst [vmem:[#allocation2] sm:$0xff] 0.0
      $region48: #{graphsage0tpk_forward.7} parent=43 // pred_fallthru
        _
      %v267 = vld [vmem:[#allocation2] sm:$0xff]
      %v268 = vld [vmem:[%s253] sm:$0xff]
      %v269 = vld [vmem:[%s253 + $0x8] sm:$0xff]
      %v270 = vld [vmem:[%s259] sm:$0xff]
      %v271 = vld [vmem:[%s259 + $0x8] sm:$0xff]
      %v272 = vld [vmem:[%s259 + $0x10] sm:$0xff]
      %v273 = vld [vmem:[%s259 + $0x18] sm:$0xff]
      %v274 = vld [vmem:[%s259 + $0x20] sm:$0xff]
      %v275 = vld [vmem:[%s259 + $0x28] sm:$0xff]
      %v276 = vld [vmem:[%s259 + $0x30] sm:$0xff]
      %v277 = vld [vmem:[%s259 + $0x38] sm:$0xff]
      %v278 = vld [vmem:[%s259 + $0x40] sm:$0xff]
      %v279 = vld [vmem:[%s259 + $0x48] sm:$0xff]
      %v280 = vld [vmem:[%s259 + $0x50] sm:$0xff]
      %v281 = vld [vmem:[%s259 + $0x58] sm:$0xff]
      %v282 = vld [vmem:[%s259 + $0x60] sm:$0xff]
      %v283 = vld [vmem:[%s259 + $0x68] sm:$0xff]
      %v284 = vld [vmem:[%s259 + $0x70] sm:$0xff]
      %v285 = vld [vmem:[%s259 + $0x78] sm:$0xff]
      %v286 = vld [vmem:[%s259 + $0x80] sm:$0xff]
      %v287 = vld [vmem:[%s259 + $0x88] sm:$0xff]
      %v288 = vld [vmem:[%s259 + $0x90] sm:$0xff]
      %v289 = vld [vmem:[%s259 + $0x98] sm:$0xff]
      %v290 = vld [vmem:[%s259 + $0xa0] sm:$0xff]
      %v291 = vld [vmem:[%s259 + $0xa8] sm:$0xff]
      %v292 = vld [vmem:[%s259 + $0xb0] sm:$0xff]
      %v293 = vld [vmem:[%s259 + $0xb8] sm:$0xff]
      %v294 = vld [vmem:[%s259 + $0xc0] sm:$0xff]
      %v295 = vld [vmem:[%s259 + $0xc8] sm:$0xff]
      %v296 = vld [vmem:[%s259 + $0xd0] sm:$0xff]
      %v297 = vld [vmem:[%s259 + $0xd8] sm:$0xff]
      %v298 = vld [vmem:[%s259 + $0xe0] sm:$0xff]
      %v299 = vld [vmem:[%s259 + $0xe8] sm:$0xff]
      %v300 = vld [vmem:[%s259 + $0xf0] sm:$0xff]
      %v301 = vld [vmem:[%s259 + $0xf8] sm:$0xff]
      %302 = vmatprep.subr.mxu0 0.0
      %303 = vmatpush1.msra.mxu0 %v270
      %304 = vmatprep.subr.mxu0 0.0
      %305 = vmatpush1.msra.mxu0 %v271
      %306 = vmatprep.subr.mxu0 0.0
      %307 = vmatpush1.msra.mxu0 %v272
      %308 = vmatprep.subr.mxu0 0.0
      %309 = vmatpush1.msra.mxu0 %v273
      %310 = vmatprep.subr.mxu0 0.0
      %311 = vmatpush1.msra.mxu0 %v274
      %312 = vmatprep.subr.mxu0 0.0
      %313 = vmatpush1.msra.mxu0 %v275
      %314 = vmatprep.subr.mxu0 0.0
      %315 = vmatpush1.msra.mxu0 %v276
      %316 = vmatprep.subr.mxu0 0.0
      %317 = vmatpush1.msra.mxu0 %v277
      %318 = vmatprep.subr.mxu0 0.0
      %319 = vmatpush1.msra.mxu0 %v278
      %320 = vmatprep.subr.mxu0 0.0
      %321 = vmatpush1.msra.mxu0 %v279
      %322 = vmatprep.subr.mxu0 0.0
      %323 = vmatpush1.msra.mxu0 %v280
      %324 = vmatprep.subr.mxu0 0.0
      %325 = vmatpush1.msra.mxu0 %v281
      %326 = vmatprep.subr.mxu0 0.0
      %327 = vmatpush1.msra.mxu0 %v282
      %328 = vmatprep.subr.mxu0 0.0
      %329 = vmatpush1.msra.mxu0 %v283
      %330 = vmatprep.subr.mxu0 0.0
      %331 = vmatpush1.msra.mxu0 %v284
      %332 = vmatprep.subr.mxu0 0.0
      %333 = vmatpush1.msra.mxu0 %v285
      %334 = vmatprep.subr.mxu0 0.0
      %335 = vmatpush1.msra.mxu0 %v286
      %336 = vmatprep.subr.mxu0 0.0
      %337 = vmatpush1.msra.mxu0 %v287
      %338 = vmatprep.subr.mxu0 0.0
      %339 = vmatpush1.msra.mxu0 %v288
      %340 = vmatprep.subr.mxu0 0.0
      %341 = vmatpush1.msra.mxu0 %v289
      %342 = vmatprep.subr.mxu0 0.0
      %343 = vmatpush1.msra.mxu0 %v290
      %344 = vmatprep.subr.mxu0 0.0
      %345 = vmatpush1.msra.mxu0 %v291
      %346 = vmatprep.subr.mxu0 0.0
      %347 = vmatpush1.msra.mxu0 %v292
      %348 = vmatprep.subr.mxu0 0.0
      %349 = vmatpush1.msra.mxu0 %v293
      %350 = vmatprep.subr.mxu0 0.0
      %351 = vmatpush1.msra.mxu0 %v294
      %352 = vmatprep.subr.mxu0 0.0
      %353 = vmatpush1.msra.mxu0 %v295
      %354 = vmatprep.subr.mxu0 0.0
      %355 = vmatpush1.msra.mxu0 %v296
      %356 = vmatprep.subr.mxu0 0.0
      %357 = vmatpush1.msra.mxu0 %v297
      %358 = vmatprep.subr.mxu0 0.0
      %359 = vmatpush1.msra.mxu0 %v298
      %360 = vmatprep.subr.mxu0 0.0
      %361 = vmatpush1.msra.mxu0 %v299
      %362 = vmatprep.subr.mxu0 0.0
      %363 = vmatpush1.msra.mxu0 %v300
      %364 = vmatprep.subr.mxu0 0.0
      %365 = vmatpush1.msra.mxu0 %v301
      %366 = vmatprep.mubr.f32.mxu0 %v269
      %367 = vmatmul.mubr.f32.gmra.mrb[0].mxu0 %v268
      %v368 = vpop.f32.mrb[0].mxu0
      %v369 = vadd.f32 0.0, %v368
      %v370 = vpop.f32.mrb[0].mxu0
      %371 = vdwg.mxu0
      %v372 = vadd.f32 %v267, %v369
      %373 = vst [vmem:[#allocation2] sm:$0xff] %v372
      %p374 = scmp.eq.s32.totalorder %s17, 1
      // Predicated region
      $region49: #{graphsage0tpk_forward.7} parent=43 // pred_check
        %p375 = pneg %p374
      $region50: #{graphsage0tpk_forward.7} parent=43 // pred_check_branch
        %377 = sbr.rel (%p375) target = $region52
      $region51: #{graphsage0tpk_forward.7} parent=43 // pred_region
        %v378 = vld [vmem:[#allocation2] sm:$0xff]
        %v379 = vpack.c.bf16 %v378, %v378
        %v380 = vld [vmem:[%s2] sm:$0xf]
        %v381 = vld [vmem:[%s2 + $0x4] sm:$0xf]
        %v382 = vld [vmem:[%s2 + $0x8] sm:$0xf]
        %v383 = vld [vmem:[%s2 + $0xc] sm:$0xf]
        %v384 = vld [vmem:[%s2 + $0x10] sm:$0xf]
        %v385 = vld [vmem:[%s2 + $0x14] sm:$0xf]
        %v386 = vld [vmem:[%s2 + $0x18] sm:$0xf]
        %v387 = vld [vmem:[%s2 + $0x1c] sm:$0xf]
        %v388 = vld [vmem:[%s2 + $0x20] sm:$0xf]
        %v389 = vld [vmem:[%s2 + $0x24] sm:$0xf]
        %v390 = vld [vmem:[%s2 + $0x28] sm:$0xf]
        %v391 = vld [vmem:[%s2 + $0x2c] sm:$0xf]
        %v392 = vld [vmem:[%s2 + $0x30] sm:$0xf]
        %v393 = vld [vmem:[%s2 + $0x34] sm:$0xf]
        %v394 = vld [vmem:[%s2 + $0x38] sm:$0xf]
        %v395 = vld [vmem:[%s2 + $0x3c] sm:$0xf]
        %v396 = vld [vmem:[%s3] sm:$0x1]
        %v398 = vlaneseq
        %v399 = vshrl.u32 %v398, 7
        %v400 = vsub.s32 0, %v399
        %v401 = vrot.slane %v396, %v400
        %v419 = vunpack.c.l.b16 %v380
        %v420 = vunpack.c.l.b16 %v381
        %v421 = vunpack.c.l.b16 %v382
        %v422 = vunpack.c.l.b16 %v383
        %v423 = vunpack.c.l.b16 %v384
        %v424 = vunpack.c.l.b16 %v385
        %v425 = vunpack.c.l.b16 %v386
        %v426 = vunpack.c.l.b16 %v387
        %v427 = vunpack.c.l.b16 %v388
        %v428 = vunpack.c.l.b16 %v389
        %v429 = vunpack.c.l.b16 %v390
        %v430 = vunpack.c.l.b16 %v391
        %v431 = vunpack.c.l.b16 %v392
        %v432 = vunpack.c.l.b16 %v393
        %v433 = vunpack.c.l.b16 %v394
        %v434 = vunpack.c.l.b16 %v395
        %v435 = vpack.c.b16 %v420, %v419
        %v436 = vpack.c.b16 %v422, %v421
        %v437 = vpack.c.b16 %v424, %v423
        %v438 = vpack.c.b16 %v426, %v425
        %v439 = vpack.c.b16 %v428, %v427
        %v440 = vpack.c.b16 %v430, %v429
        %v441 = vpack.c.b16 %v432, %v431
        %v442 = vpack.c.b16 %v434, %v433
        %451 = vmatprep.subr.bf16.mxu0 0
        %452 = vmatpush1.bf16.msra.mxu0 %v435
        %453 = vmatprep.subr.bf16.mxu0 0
        %454 = vmatpush1.bf16.msra.mxu0 %v436
        %455 = vmatprep.subr.bf16.mxu0 0
        %456 = vmatpush1.bf16.msra.mxu0 %v437
        %457 = vmatprep.subr.bf16.mxu0 0
        %458 = vmatpush1.bf16.msra.mxu0 %v438
        %459 = vmatprep.subr.bf16.mxu0 0
        %460 = vmatpush1.bf16.msra.mxu0 %v439
        %461 = vmatprep.subr.bf16.mxu0 0
        %462 = vmatpush1.bf16.msra.mxu0 %v440
        %463 = vmatprep.subr.bf16.mxu0 0
        %464 = vmatpush1.bf16.msra.mxu0 %v441
        %465 = vmatprep.subr.bf16.mxu0 0
        %466 = vmatpush1.bf16.msra.mxu0 %v442
        %467 = vmatprep.subr.bf16.mxu0 0
        %468 = vmatpush1.bf16.msra.mxu0 0
        %469 = vmatprep.subr.bf16.mxu0 0
        %470 = vmatpush1.bf16.msra.mxu0 0
        %471 = vmatprep.subr.bf16.mxu0 0
        %472 = vmatpush1.bf16.msra.mxu0 0
        %473 = vmatprep.subr.bf16.mxu0 0
        %474 = vmatpush1.bf16.msra.mxu0 0
        %475 = vmatprep.subr.bf16.mxu0 0
        %476 = vmatpush1.bf16.msra.mxu0 0
        %477 = vmatprep.subr.bf16.mxu0 0
        %478 = vmatpush1.bf16.msra.mxu0 0
        %479 = vmatprep.subr.bf16.mxu0 0
        %480 = vmatpush1.bf16.msra.mxu0 0
        %481 = vmatprep.subr.bf16.mxu0 0
        %482 = vmatpush1.bf16.msra.mxu0 0
        %483 = vmatprep.mubr.bf16.mxu0 0
        %484 = vmatmul.mubr.bf16.gmra.mrb[0].mxu0 %v379
        %v485 = vpop.f32.mrb[0].mxu0
        %v486 = vadd.f32 %v401, %v485
        %v487 = vpop.f32.mrb[0].mxu0
        %v488 = vpop.f32.mrb[0].mxu0
        %v489 = vpop.f32.mrb[0].mxu0
        %490 = vdwg.mxu0
        %v491 = vmax.f32 %v486, 0.0
        %v492 = vpack.c.bf16 %v491, %v491
        %v493 = vld [vmem:[%s4] sm:$0xf]
        %v494 = vld [vmem:[%s4 + $0x4] sm:$0xf]
        %v495 = vld [vmem:[%s4 + $0x8] sm:$0xf]
        %v496 = vld [vmem:[%s4 + $0xc] sm:$0xf]
        %v497 = vld [vmem:[%s4 + $0x10] sm:$0xf]
        %v498 = vld [vmem:[%s4 + $0x14] sm:$0xf]
        %v499 = vld [vmem:[%s4 + $0x18] sm:$0xf]
        %v500 = vld [vmem:[%s4 + $0x1c] sm:$0xf]
        %v501 = vld [vmem:[%s5] sm:$0x1]
        %v503 = vlaneseq
        %v504 = vshrl.u32 %v503, 7
        %v505 = vsub.s32 0, %v504
        %v506 = vrot.slane %v501, %v505
        %v516 = vunpack.c.l.b16 %v493
        %v517 = vunpack.c.l.b16 %v494
        %v518 = vunpack.c.l.b16 %v495
        %v519 = vunpack.c.l.b16 %v496
        %v520 = vunpack.c.l.b16 %v497
        %v521 = vunpack.c.l.b16 %v498
        %v522 = vunpack.c.l.b16 %v499
        %v523 = vunpack.c.l.b16 %v500
        %v524 = vpack.c.b16 %v517, %v516
        %v525 = vpack.c.b16 %v519, %v518
        %v526 = vpack.c.b16 %v521, %v520
        %v527 = vpack.c.b16 %v523, %v522
        %vm532 = vcmask 523264
        %v534 = vsel %vm532, %v492, 0
        %536 = vmatprep.subr.bf16.mxu0 0
        %537 = vmatpush1.bf16.msra.mxu0 %v524
        %538 = vmatprep.subr.bf16.mxu0 0
        %539 = vmatpush1.bf16.msra.mxu0 %v525
        %540 = vmatprep.subr.bf16.mxu0 0
        %541 = vmatpush1.bf16.msra.mxu0 %v526
        %542 = vmatprep.subr.bf16.mxu0 0
        %543 = vmatpush1.bf16.msra.mxu0 %v527
        %544 = vmatprep.subr.bf16.mxu0 0
        %545 = vmatpush1.bf16.msra.mxu0 0
        %546 = vmatprep.subr.bf16.mxu0 0
        %547 = vmatpush1.bf16.msra.mxu0 0
        %548 = vmatprep.subr.bf16.mxu0 0
        %549 = vmatpush1.bf16.msra.mxu0 0
        %550 = vmatprep.subr.bf16.mxu0 0
        %551 = vmatpush1.bf16.msra.mxu0 0
        %552 = vmatprep.subr.bf16.mxu0 0
        %553 = vmatpush1.bf16.msra.mxu0 0
        %554 = vmatprep.subr.bf16.mxu0 0
        %555 = vmatpush1.bf16.msra.mxu0 0
        %556 = vmatprep.subr.bf16.mxu0 0
        %557 = vmatpush1.bf16.msra.mxu0 0
        %558 = vmatprep.subr.bf16.mxu0 0
        %559 = vmatpush1.bf16.msra.mxu0 0
        %560 = vmatprep.subr.bf16.mxu0 0
        %561 = vmatpush1.bf16.msra.mxu0 0
        %562 = vmatprep.subr.bf16.mxu0 0
        %563 = vmatpush1.bf16.msra.mxu0 0
        %564 = vmatprep.subr.bf16.mxu0 0
        %565 = vmatpush1.bf16.msra.mxu0 0
        %566 = vmatprep.subr.bf16.mxu0 0
        %567 = vmatpush1.bf16.msra.mxu0 0
        %568 = vmatprep.mubr.bf16.mxu0 0
        %569 = vmatmul.mubr.bf16.gmra.mrb[0].mxu0 %v534
        %v570 = vpop.f32.mrb[0].mxu0
        %v571 = vadd.f32 %v506, %v570
        %v572 = vpop.f32.mrb[0].mxu0
        %v573 = vpop.f32.mrb[0].mxu0
        %v574 = vpop.f32.mrb[0].mxu0
        %575 = vdwg.mxu0
        %vm576 = vcmask 31744
        %v577 = vsel %vm576, %v571, -inf
        %578 = vmax.xlane.f32.xlu0 %v577
        %v579 = vpop.xlane.xlu0 %578
        %v580 = vsub.f32 %v571, %v579
        %v581 = vmul.f32 %v580, 1.442695
        %v582 = vpow.pop %v581
        %v583 = vsel %vm576, %v582, 0.0
        %584 = vadd.xlane.f32.xlu0 %v583
        %v585 = vpop.xlane.xlu0 %584
        %v586 = vlog2.pop %v585
        %v587 = vmul.f32 %v586, 0.6931472
        %v588 = vadd.f32 %v587, %v579
        %v589 = vsub.f32 %v571, %v588
        %590 = vst.msk [vmem:[%s6] sm:$0xff] %vm576, %v589
      $region52: #{graphsage0tpk_forward.7} parent=43 // pred_fallthru
        _
      // Predicated region
      $region53: #{graphsage0tpk_forward.7} parent=43 // pred_check
        %p591 = pneg %p166
      $region54: #{graphsage0tpk_forward.7} parent=43 // pred_check_branch
        %593 = sbr.rel (%p591) target = $region56
      $region55: #{graphsage0tpk_forward.7} parent=43 // pred_region
        _
      $region56: #{graphsage0tpk_forward.7} parent=43 // pred_fallthru
        _
      // Predicated region
      $region57: #{graphsage0tpk_forward.7} parent=43 // pred_check
        %p594 = pneg %p166
      $region58: #{graphsage0tpk_forward.7} parent=43 // pred_check_branch
        %596 = sbr.rel (%p594) target = $region60
      $region59: #{graphsage0tpk_forward.7} parent=43 // pred_region
        _
      $region60: #{graphsage0tpk_forward.7} parent=43 // pred_fallthru
        _
    $region44: #{graphsage0tpk_forward.7} parent=5 // pred_fallthru
      _
    %p597 = scmp.le.s32.totalorder 2, %s12
    // Predicated region
    $region61: #{graphsage0tpk_forward.7} parent=5 // pred_check
      %p598 = pneg %p597
    $region62: #{graphsage0tpk_forward.7} parent=5 // pred_check_branch
      %600 = sbr.rel (%p598) target = $region64
    $region63: #{graphsage0tpk_forward.7} parent=5 // pred_region
      %s601 = ssub.s32 %s12, 2
    $region64: #{graphsage0tpk_forward.7} parent=5 // pred_fallthru
      _
  $region6: #{graphsage0tpk_forward.7} parent=0 // loop_footer
    %s16 = sadd.s32 1, %s12
  $region7: #{graphsage0tpk_forward.7} parent=0 // loop_footer_branch
    %11 = sbr.rel target = $region3
  $region8: #{graphsage0tpk_forward.7} parent=0 // loop_exit
    _

// kernel: graphsage0tpk_forward.4
$region0: #{graphsage0tpk_forward.4}
  #allocation0 [shape = 'u32[]', space=smem, size = 0x4, offset = 0x4, fixed_abs, tag = 'smem constant byte address 0x4 - core index']
  #allocation1 [shape = 'u32[144,128]{1,0:T(1,128)}', space=vmem, size = 0x12000, scoped, tag = 'internal scratch']
  #allocation2 [shape = 'f32[256,128]{1,0:T(8,128)}', space=vmem, size = 0x20000, scoped, tag = 'scratch operand']
  %s0 = inlined_call_operand.vmem [shape: f32[512,512], index: 0, kind: input, shape index: {}]
  %s1 = inlined_call_operand.vmem [shape: f32[512,128], index: 1, kind: input, shape index: {}, may-alias: {1,2}]
  %s2 = inlined_call_operand.vmem [shape: f32[512,128], index: 2, kind: input, shape index: {}, may-alias: {1,2}]
  %s3 = inlined_call_operand.vmem [shape: bf16[256,128], index: 3, kind: input, shape index: {}]
  %s4 = inlined_call_operand.vmem [shape: f32[1,128], index: 4, kind: input, shape index: {}]
  %s5 = inlined_call_operand.vmem [shape: f32[512,128], index: 5, kind: output, shape index: {}]
  %s6 = sld [smem:[#allocation0]]
  $region84: #{graphsage0tpk_forward.4} parent=0
    _
  %s8 = ssub.s32 1, %s6
  %s9 = scalar_select 0, %s8, %s6
  $region1: #{graphsage0tpk_forward.4} parent=0
    #allocation3 [shape = 'u8[524288]{0}', space=vmem, size = 0x80000, scoped, tag = 'input window, operand 0']
    loop: start=0, step=1, limit=6
    $region2: #{graphsage0tpk_forward.4} parent=1 // loop_pre_header
      _
    $region3: #{graphsage0tpk_forward.4} parent=1 // loop_header
      %s11 = sphi 0, %s15
      %p12 = scmp.ge.s32.totalorder %s11, 6
      %s18 = sphi 0, %s30
      %s19 = sphi 0, %s26
      %s20 = sphi 0, %s18
      %s21 = sphi 0, %s19
      %s22 = sphi 0, %s20
      %s23 = sphi 0, %s21
      %s35 = sphi 0, %s37
      %s38 = sphi 0, %s35
      %s39 = sphi 0, %s38
      %s55 = sphi 0, %s39
      %s61 = sphi 0, %s63
      %s64 = sphi 0, %s61
      %s65 = sphi 0, %s64
      %s81 = sphi 0, %s65
      %s87 = sphi 0, %s89
      %s90 = sphi 0, %s87
      %s91 = sphi 0, %s90
      %s107 = sphi 0, %s91
      %s111 = sphi 0, %s111
      %s113 = sphi 0, %s111
      %s114 = sphi 0, %s113
      %s128 = sphi 0, %s114
      %s132 = sphi 0, %s132
      %s134 = sphi 0, %s132
      %s135 = sphi 0, %s134
      %s149 = sphi 0, %s135
      %s155 = sphi 0, %s157
      %s158 = sphi 0, %s155
      %s159 = sphi 0, %s158
      %s175 = sphi 0, %s159
    $region4: #{graphsage0tpk_forward.4} parent=1 // loop_header_branch
      %14 = sbr.rel (%p12) target = $region8
    $region5: #{graphsage0tpk_forward.4} parent=1 // loop_body
      %s16 = ssub.s32 %s11, 1
      %s17 = ssub.s32 %s11, 2
      %s24 = sadd.s32 1, %s19
      %p25 = scmp.ge.s32.totalorder %s24, 2
      %s26 = scalar_select %p25, 0, %s24
      %s27 = sadd.s32 1, %s18
      %s28 = scalar_select %p25, %s27, %s18
      %p29 = scmp.ge.s32.totalorder %s28, 2
      %s30 = scalar_select %p29, 0, %s28
      %s31 = ssub.s32 %s18, %s30
      %s32 = ssub.s32 %s19, %s26
      %s33 = sor.u32 %s31, %s32
      %p34 = scmp.eq.s32.totalorder %s33, 0
      %s36 = sadd.s32 %s35, 1
      %s37 = scalar_select %p34, %s35, %s36
      %p40 = pneg %p34
      %p41 = scmp.eq.s32.totalorder %s11, 3
      %p42 = por %p40, %p41
      %p43 = scmp.ne.s32.totalorder %s35, %s38
      %p44 = scmp.eq.s32.totalorder %s11, 0
      %p45 = por %p43, %p44
      %p46 = scmp.ne.s32.totalorder %s35, %s38
      %p47 = scmp.eq.s32.totalorder %s16, 3
      %p48 = por %p46, %p47
      %p49 = scmp.ne.s32.totalorder %s38, %s39
      %p50 = scmp.eq.s32.totalorder %s16, 0
      %p51 = por %p49, %p50
      %p52 = scmp.ne.s32.totalorder %s38, %s39
      %p53 = scmp.eq.s32.totalorder %s17, 3
      %p54 = por %p52, %p53
      %p56 = scmp.ne.s32.totalorder %s39, %s55
      %p57 = scmp.eq.s32.totalorder %s17, 0
      %p58 = por %p56, %p57
      %s59 = ssub.s32 %s19, %s26
      %p60 = scmp.eq.s32.totalorder %s59, 0
      %s62 = sadd.s32 %s61, 1
      %s63 = scalar_select %p60, %s61, %s62
      %p66 = pneg %p60
      %p67 = scmp.eq.s32.totalorder %s11, 3
      %p68 = por %p66, %p67
      %p69 = scmp.ne.s32.totalorder %s61, %s64
      %p70 = scmp.eq.s32.totalorder %s11, 0
      %p71 = por %p69, %p70
      %p72 = scmp.ne.s32.totalorder %s61, %s64
      %p73 = scmp.eq.s32.totalorder %s16, 3
      %p74 = por %p72, %p73
      %p75 = scmp.ne.s32.totalorder %s64, %s65
      %p76 = scmp.eq.s32.totalorder %s16, 0
      %p77 = por %p75, %p76
      %p78 = scmp.ne.s32.totalorder %s64, %s65
      %p79 = scmp.eq.s32.totalorder %s17, 3
      %p80 = por %p78, %p79
      %p82 = scmp.ne.s32.totalorder %s65, %s81
      %p83 = scmp.eq.s32.totalorder %s17, 0
      %p84 = por %p82, %p83
      %s85 = ssub.s32 %s18, %s30
      %p86 = scmp.eq.s32.totalorder %s85, 0
      %s88 = sadd.s32 %s87, 1
      %s89 = scalar_select %p86, %s87, %s88
      %p92 = pneg %p86
      %p93 = scmp.eq.s32.totalorder %s11, 3
      %p94 = por %p92, %p93
      %p95 = scmp.ne.s32.totalorder %s87, %s90
      %p96 = scmp.eq.s32.totalorder %s11, 0
      %p97 = por %p95, %p96
      %p98 = scmp.ne.s32.totalorder %s87, %s90
      %p99 = scmp.eq.s32.totalorder %s16, 3
      %p100 = por %p98, %p99
      %p101 = scmp.ne.s32.totalorder %s90, %s91
      %p102 = scmp.eq.s32.totalorder %s16, 0
      %p103 = por %p101, %p102
      %p104 = scmp.ne.s32.totalorder %s90, %s91
      %p105 = scmp.eq.s32.totalorder %s17, 3
      %p106 = por %p104, %p105
      %p108 = scmp.ne.s32.totalorder %s91, %s107
      %p109 = scmp.eq.s32.totalorder %s17, 0
      %p110 = por %p108, %p109
      %s112 = sadd.s32 %s111, 1
      %p115 = scmp.eq.s32.totalorder %s11, 3
      %p116 = scmp.ne.s32.totalorder %s111, %s113
      %p117 = scmp.eq.s32.totalorder %s11, 0
      %p118 = por %p116, %p117
      %p119 = scmp.ne.s32.totalorder %s111, %s113
      %p120 = scmp.eq.s32.totalorder %s16, 3
      %p121 = por %p119, %p120
      %p122 = scmp.ne.s32.totalorder %s113, %s114
      %p123 = scmp.eq.s32.totalorder %s16, 0
      %p124 = por %p122, %p123
      %p125 = scmp.ne.s32.totalorder %s113, %s114
      %p126 = scmp.eq.s32.totalorder %s17, 3
      %p127 = por %p125, %p126
      %p129 = scmp.ne.s32.totalorder %s114, %s128
      %p130 = scmp.eq.s32.totalorder %s17, 0
      %p131 = por %p129, %p130
      %s133 = sadd.s32 %s132, 1
      %p136 = scmp.eq.s32.totalorder %s11, 3
      %p137 = scmp.ne.s32.totalorder %s132, %s134
      %p138 = scmp.eq.s32.totalorder %s11, 0
      %p139 = por %p137, %p138
      %p140 = scmp.ne.s32.totalorder %s132, %s134
      %p141 = scmp.eq.s32.totalorder %s16, 3
      %p142 = por %p140, %p141
      %p143 = scmp.ne.s32.totalorder %s134, %s135
      %p144 = scmp.eq.s32.totalorder %s16, 0
      %p145 = por %p143, %p144
      %p146 = scmp.ne.s32.totalorder %s134, %s135
      %p147 = scmp.eq.s32.totalorder %s17, 3
      %p148 = por %p146, %p147
      %p150 = scmp.ne.s32.totalorder %s135, %s149
      %p151 = scmp.eq.s32.totalorder %s17, 0
      %p152 = por %p150, %p151
      %s153 = ssub.s32 %s18, %s30
      %p154 = scmp.eq.s32.totalorder %s153, 0
      %s156 = sadd.s32 %s155, 1
      %s157 = scalar_select %p154, %s155, %s156
      %p160 = pneg %p154
      %p161 = scmp.eq.s32.totalorder %s11, 3
      %p162 = por %p160, %p161
      %p163 = scmp.ne.s32.totalorder %s155, %s158
      %p164 = scmp.eq.s32.totalorder %s11, 0
      %p165 = por %p163, %p164
      %p166 = scmp.ne.s32.totalorder %s155, %s158
      %p167 = scmp.eq.s32.totalorder %s16, 3
      %p168 = por %p166, %p167
      %p169 = scmp.ne.s32.totalorder %s158, %s159
      %p170 = scmp.eq.s32.totalorder %s16, 0
      %p171 = por %p169, %p170
      %p172 = scmp.ne.s32.totalorder %s158, %s159
      %p173 = scmp.eq.s32.totalorder %s17, 3
      %p174 = por %p172, %p173
      %p176 = scmp.ne.s32.totalorder %s159, %s175
      %p177 = scmp.eq.s32.totalorder %s17, 0
      %p178 = por %p176, %p177
      %p179 = scmp.le.s32.totalorder 1, %s11
      %p180 = scmp.lt.s32.totalorder %s11, 5
      %p181 = pnand %p179, %p180
      %p182 = pneg %p181
      // Predicated region
      $region9: #{graphsage0tpk_forward.4} parent=5 // pred_check
        _
      $region10: #{graphsage0tpk_forward.4} parent=5 // pred_check_branch
        %184 = sbr.rel (%p181) target = $region12
      $region11: #{graphsage0tpk_forward.4} parent=5 // pred_region
        %s185 = ssub.s32 %s11, 1
        // Predicated region
        $region13: #{graphsage0tpk_forward.4} parent=11 // pred_check
          %p186 = pneg %p124
        $region14: #{graphsage0tpk_forward.4} parent=11 // pred_check_branch
          %188 = sbr.rel (%p186) target = $region16
        $region15: #{graphsage0tpk_forward.4} parent=11 // pred_region
          _
        $region16: #{graphsage0tpk_forward.4} parent=11 // pred_fallthru
          _
        // Predicated region
        $region17: #{graphsage0tpk_forward.4} parent=11 // pred_check
          %p189 = pneg %p145
        $region18: #{graphsage0tpk_forward.4} parent=11 // pred_check_branch
          %191 = sbr.rel (%p189) target = $region20
        $region19: #{graphsage0tpk_forward.4} parent=11 // pred_region
          _
        $region20: #{graphsage0tpk_forward.4} parent=11 // pred_fallthru
          _
      $region12: #{graphsage0tpk_forward.4} parent=5 // pred_fallthru
        _
      %p192 = scmp.lt.s32.totalorder %s11, 4
      // Predicated region
      $region21: #{graphsage0tpk_forward.4} parent=5 // pred_check
        %p193 = pneg %p192
      $region22: #{graphsage0tpk_forward.4} parent=5 // pred_check_branch
        %195 = sbr.rel (%p193) target = $region24
      $region23: #{graphsage0tpk_forward.4} parent=5 // pred_region
        // Predicated region
        $region25: #{graphsage0tpk_forward.4} parent=23 // pred_check
          %p196 = pneg %p45
        $region26: #{graphsage0tpk_forward.4} parent=23 // pred_check_branch
          %198 = sbr.rel (%p196) target = $region28
        $region27: #{graphsage0tpk_forward.4} parent=23 // pred_region
          %s199 = sand.u32 %s35, 1
          %s200 = sand.u32 %s35, 1
          %s201 = smul.addr %s200, 512
          %s202 = scalar_lea.vmem [#allocation3], %s201
          %s203 = smul.u32 32, %s18
          %s204 = smul.u32 2, %s19
          %s205 = smul.addr %s203, 4
          %s206 = sadd.s32 %s204, %s205
          %s207 = smul.addr %s206, 8
          %s208 = scalar_lea.vmem %s0, %s207
          // Predicated region
          $region29: #{graphsage0tpk_forward.4} parent=27 // pred_check
            _
          $region30: #{graphsage0tpk_forward.4} parent=27 // pred_check_branch
            %210 = sbr.rel (0) target = $region32
          $region31: #{graphsage0tpk_forward.4} parent=27 // pred_region
            // Predicated region
            $region33: #{graphsage0tpk_forward.4} parent=31 // pred_check
              _
            $region34: #{graphsage0tpk_forward.4} parent=31 // pred_check_branch
              %212 = sbr.rel (0) target = $region36
            $region35: #{graphsage0tpk_forward.4} parent=31 // pred_region
              loop: start=0, step=1, limit=1
              $region37: #{graphsage0tpk_forward.4} parent=35 // loop_pre_header
                _
              $region38: #{graphsage0tpk_forward.4} parent=35 // loop_header
                %s214 = sphi 0, %s218
                %p215 = scmp.ge.s32.totalorder %s214, 1
                %s219 = sphi %s208, %s208
                %s220 = sphi %s202, %s202
              $region39: #{graphsage0tpk_forward.4} parent=35 // loop_header_branch
                %217 = sbr.rel (%p215) target = $region43
              $region40: #{graphsage0tpk_forward.4} parent=35 // loop_body
                %v221 = vld [vmem:[%s219] sm:$0xff]
                %222 = vst [vmem:[%s220] sm:$0xff] %v221
                %v223 = vld [vmem:[%s219 + $0x8] sm:$0xff]
                %224 = vst [vmem:[%s220 + $0x8] sm:$0xff] %v223
                %v225 = vld [vmem:[%s219 + $0x20] sm:$0xff]
                %226 = vst [vmem:[%s220 + $0x10] sm:$0xff] %v225
                %v227 = vld [vmem:[%s219 + $0x28] sm:$0xff]
                %228 = vst [vmem:[%s220 + $0x18] sm:$0xff] %v227
                %v229 = vld [vmem:[%s219 + $0x40] sm:$0xff]
                %230 = vst [vmem:[%s220 + $0x20] sm:$0xff] %v229
                %v231 = vld [vmem:[%s219 + $0x48] sm:$0xff]
                %232 = vst [vmem:[%s220 + $0x28] sm:$0xff] %v231
                %v233 = vld [vmem:[%s219 + $0x60] sm:$0xff]
                %234 = vst [vmem:[%s220 + $0x30] sm:$0xff] %v233
                %v235 = vld [vmem:[%s219 + $0x68] sm:$0xff]
                %236 = vst [vmem:[%s220 + $0x38] sm:$0xff] %v235
                %v237 = vld [vmem:[%s219 + $0x80] sm:$0xff]
                %238 = vst [vmem:[%s220 + $0x40] sm:$0xff] %v237
                %v239 = vld [vmem:[%s219 + $0x88] sm:$0xff]
                %240 = vst [vmem:[%s220 + $0x48] sm:$0xff] %v239
                %v241 = vld [vmem:[%s219 + $0xa0] sm:$0xff]
                %242 = vst [vmem:[%s220 + $0x50] sm:$0xff] %v241
                %v243 = vld [vmem:[%s219 + $0xa8] sm:$0xff]
                %244 = vst [vmem:[%s220 + $0x58] sm:$0xff] %v243
                %v245 = vld [vmem:[%s219 + $0xc0] sm:$0xff]
                %246 = vst [vmem:[%s220 + $0x60] sm:$0xff] %v245
                %v247 = vld [vmem:[%s219 + $0xc8] sm:$0xff]
                %248 = vst [vmem:[%s220 + $0x68] sm:$0xff] %v247
                %v249 = vld [vmem:[%s219 + $0xe0] sm:$0xff]
                %250 = vst [vmem:[%s220 + $0x70] sm:$0xff] %v249
                %v251 = vld [vmem:[%s219 + $0xe8] sm:$0xff]
                %252 = vst [vmem:[%s220 + $0x78] sm:$0xff] %v251
                %v253 = vld [vmem:[%s219 + $0x100] sm:$0xff]
                %254 = vst [vmem:[%s220 + $0x80] sm:$0xff] %v253
                %v255 = vld [vmem:[%s219 + $0x108] sm:$0xff]
                %256 = vst [vmem:[%s220 + $0x88] sm:$0xff] %v255
                %v257 = vld [vmem:[%s219 + $0x120] sm:$0xff]
                %258 = vst [vmem:[%s220 + $0x90] sm:$0xff] %v257
                %v259 = vld [vmem:[%s219 + $0x128] sm:$0xff]
                %260 = vst [vmem:[%s220 + $0x98] sm:$0xff] %v259
                %v261 = vld [vmem:[%s219 + $0x140] sm:$0xff]
                %262 = vst [vmem:[%s220 + $0xa0] sm:$0xff] %v261
                %v263 = vld [vmem:[%s219 + $0x148] sm:$0xff]
                %264 = vst [vmem:[%s220 + $0xa8] sm:$0xff] %v263
                %v265 = vld [vmem:[%s219 + $0x160] sm:$0xff]
                %266 = vst [vmem:[%s220 + $0xb0] sm:$0xff] %v265
                %v267 = vld [vmem:[%s219 + $0x168] sm:$0xff]
                %268 = vst [vmem:[%s220 + $0xb8] sm:$0xff] %v267
                %v269 = vld [vmem:[%s219 + $0x180] sm:$0xff]
                %270 = vst [vmem:[%s220 + $0xc0] sm:$0xff] %v269
                %v271 = vld [vmem:[%s219 + $0x188] sm:$0xff]
                %272 = vst [vmem:[%s220 + $0xc8] sm:$0xff] %v271
                %v273 = vld [vmem:[%s219 + $0x1a0] sm:$0xff]
                %274 = vst [vmem:[%s220 + $0xd0] sm:$0xff] %v273
                %v275 = vld [vmem:[%s219 + $0x1a8] sm:$0xff]
                %276 = vst [vmem:[%s220 + $0xd8] sm:$0xff] %v275
                %v277 = vld [vmem:[%s219 + $0x1c0] sm:$0xff]
                %278 = vst [vmem:[%s220 + $0xe0] sm:$0xff] %v277
                %v279 = vld [vmem:[%s219 + $0x1c8] sm:$0xff]
                %280 = vst [vmem:[%s220 + $0xe8] sm:$0xff] %v279
                %v281 = vld [vmem:[%s219 + $0x1e0] sm:$0xff]
                %282 = vst [vmem:[%s220 + $0xf0] sm:$0xff] %v281
                %v283 = vld [vmem:[%s219 + $0x1e8] sm:$0xff]
                %284 = vst [vmem:[%s220 + $0xf8] sm:$0xff] %v283
                %v285 = vld [vmem:[%s219 + $0x200] sm:$0xff]
                %286 = vst [vmem:[%s220 + $0x100] sm:$0xff] %v285
                %v287 = vld [vmem:[%s219 + $0x208] sm:$0xff]
                %288 = vst [vmem:[%s220 + $0x108] sm:$0xff] %v287
                %v289 = vld [vmem:[%s219 + $0x220] sm:$0xff]
                %290 = vst [vmem:[%s220 + $0x110] sm:$0xff] %v289
                %v291 = vld [vmem:[%s219 + $0x228] sm:$0xff]
                %292 = vst [vmem:[%s220 + $0x118] sm:$0xff] %v291
                %v293 = vld [vmem:[%s219 + $0x240] sm:$0xff]
                %294 = vst [vmem:[%s220 + $0x120] sm:$0xff] %v293
                %v295 = vld [vmem:[%s219 + $0x248] sm:$0xff]
                %296 = vst [vmem:[%s220 + $0x128] sm:$0xff] %v295
                %v297 = vld [vmem:[%s219 + $0x260] sm:$0xff]
                %298 = vst [vmem:[%s220 + $0x130] sm:$0xff] %v297
                %v299 = vld [vmem:[%s219 + $0x268] sm:$0xff]
                %300 = vst [vmem:[%s220 + $0x138] sm:$0xff] %v299
                %v301 = vld [vmem:[%s219 + $0x280] sm:$0xff]
                %302 = vst [vmem:[%s220 + $0x140] sm:$0xff] %v301
                %v303 = vld [vmem:[%s219 + $0x288] sm:$0xff]
                %304 = vst [vmem:[%s220 + $0x148] sm:$0xff] %v303
                %v305 = vld [vmem:[%s219 + $0x2a0] sm:$0xff]
                %306 = vst [vmem:[%s220 + $0x150] sm:$0xff] %v305
                %v307 = vld [vmem:[%s219 + $0x2a8] sm:$0xff]
                %308 = vst [vmem:[%s220 + $0x158] sm:$0xff] %v307
                %v309 = vld [vmem:[%s219 + $0x2c0] sm:$0xff]
                %310 = vst [vmem:[%s220 + $0x160] sm:$0xff] %v309
                %v311 = vld [vmem:[%s219 + $0x2c8] sm:$0xff]
                %312 = vst [vmem:[%s220 + $0x168] sm:$0xff] %v311
                %v313 = vld [vmem:[%s219 + $0x2e0] sm:$0xff]
                %314 = vst [vmem:[%s220 + $0x170] sm:$0xff] %v313
                %v315 = vld [vmem:[%s219 + $0x2e8] sm:$0xff]
                %316 = vst [vmem:[%s220 + $0x178] sm:$0xff] %v315
                %v317 = vld [vmem:[%s219 + $0x300] sm:$0xff]
                %318 = vst [vmem:[%s220 + $0x180] sm:$0xff] %v317
                %v319 = vld [vmem:[%s219 + $0x308] sm:$0xff]
                %320 = vst [vmem:[%s220 + $0x188] sm:$0xff] %v319
                %v321 = vld [vmem:[%s219 + $0x320] sm:$0xff]
                %322 = vst [vmem:[%s220 + $0x190] sm:$0xff] %v321
                %v323 = vld [vmem:[%s219 + $0x328] sm:$0xff]
                %324 = vst [vmem:[%s220 + $0x198] sm:$0xff] %v323
                %v325 = vld [vmem:[%s219 + $0x340] sm:$0xff]
                %326 = vst [vmem:[%s220 + $0x1a0] sm:$0xff] %v325
                %v327 = vld [vmem:[%s219 + $0x348] sm:$0xff]
                %328 = vst [vmem:[%s220 + $0x1a8] sm:$0xff] %v327
                %v329 = vld [vmem:[%s219 + $0x360] sm:$0xff]
                %330 = vst [vmem:[%s220 + $0x1b0] sm:$0xff] %v329
                %v331 = vld [vmem:[%s219 + $0x368] sm:$0xff]
                %332 = vst [vmem:[%s220 + $0x1b8] sm:$0xff] %v331
                %v333 = vld [vmem:[%s219 + $0x380] sm:$0xff]
                %334 = vst [vmem:[%s220 + $0x1c0] sm:$0xff] %v333
                %v335 = vld [vmem:[%s219 + $0x388] sm:$0xff]
                %336 = vst [vmem:[%s220 + $0x1c8] sm:$0xff] %v335
                %v337 = vld [vmem:[%s219 + $0x3a0] sm:$0xff]
                %338 = vst [vmem:[%s220 + $0x1d0] sm:$0xff] %v337
                %v339 = vld [vmem:[%s219 + $0x3a8] sm:$0xff]
                %340 = vst [vmem:[%s220 + $0x1d8] sm:$0xff] %v339
                %v341 = vld [vmem:[%s219 + $0x3c0] sm:$0xff]
                %342 = vst [vmem:[%s220 + $0x1e0] sm:$0xff] %v341
                %v343 = vld [vmem:[%s219 + $0x3c8] sm:$0xff]
                %344 = vst [vmem:[%s220 + $0x1e8] sm:$0xff] %v343
                %v345 = vld [vmem:[%s219 + $0x3e0] sm:$0xff]
                %346 = vst [vmem:[%s220 + $0x1f0] sm:$0xff] %v345
                %v347 = vld [vmem:[%s219 + $0x3e8] sm:$0xff]
                %348 = vst [vmem:[%s220 + $0x1f8] sm:$0xff] %v347
              $region41: #{graphsage0tpk_forward.4} parent=35 // loop_footer
                %s218 = sadd.s32 1, %s214
              $region42: #{graphsage0tpk_forward.4} parent=35 // loop_footer_branch
                %213 = sbr.rel target = $region38
              $region43: #{graphsage0tpk_forward.4} parent=35 // loop_exit
                _
            $region36: #{graphsage0tpk_forward.4} parent=31 // pred_fallthru
              _
            // Predicated region
            $region44: #{graphsage0tpk_forward.4} parent=31 // pred_check
              _
            $region45: #{graphsage0tpk_forward.4} parent=31 // pred_check_branch
              %350 = sbr.rel target = $region47
            $region46: #{graphsage0tpk_forward.4} parent=31 // pred_region
              _
            $region47: #{graphsage0tpk_forward.4} parent=31 // pred_fallthru
              _
          $region32: #{graphsage0tpk_forward.4} parent=27 // pred_fallthru
            _
          %351 = vnop
        $region28: #{graphsage0tpk_forward.4} parent=23 // pred_fallthru
          _
        // Predicated region
        $region48: #{graphsage0tpk_forward.4} parent=23 // pred_check
          %p352 = pneg %p71
        $region49: #{graphsage0tpk_forward.4} parent=23 // pred_check_branch
          %354 = sbr.rel (%p352) target = $region51
        $region50: #{graphsage0tpk_forward.4} parent=23 // pred_region
          %s355 = smul.u32 32, %s19
          %p356 = scmp.lt.s32.totalorder %s355, 63
          %s357 = scalar_select %p356, %s355, 63
          %s358 = smul.addr %s357, 8
          %s359 = scalar_lea.vmem %s1, %s358
          %s360 = smul.u32 32, %s19
        $region51: #{graphsage0tpk_forward.4} parent=23 // pred_fallthru
          _
        // Predicated region
        $region52: #{graphsage0tpk_forward.4} parent=23 // pred_check
          %p361 = pneg %p97
        $region53: #{graphsage0tpk_forward.4} parent=23 // pred_check_branch
          %363 = sbr.rel (%p361) target = $region55
        $region54: #{graphsage0tpk_forward.4} parent=23 // pred_region
          %s364 = smul.u32 32, %s18
          %p365 = scmp.lt.s32.totalorder %s364, 63
          %s366 = scalar_select %p365, %s364, 63
          %s367 = smul.addr %s366, 8
          %s368 = scalar_lea.vmem %s2, %s367
          %s369 = smul.u32 32, %s18
        $region55: #{graphsage0tpk_forward.4} parent=23 // pred_fallthru
          _
      $region24: #{graphsage0tpk_forward.4} parent=5 // pred_fallthru
        _
      %p370 = scmp.le.s32.totalorder 1, %s11
      %p371 = scmp.lt.s32.totalorder %s11, 5
      %p372 = pnand %p370, %p371
      %p373 = pneg %p372
      // Predicated region
      $region56: #{graphsage0tpk_forward.4} parent=5 // pred_check
        _
      $region57: #{graphsage0tpk_forward.4} parent=5 // pred_check_branch
        %375 = sbr.rel (%p372) target = $region59
      $region58: #{graphsage0tpk_forward.4} parent=5 // pred_region
        %s376 = ssub.s32 %s11, 1
        %s377 = sand.u32 %s38, 1
        %s378 = sand.u32 %s38, 1
        %s379 = smul.addr %s378, 512
        %s380 = scalar_lea.vmem [#allocation3], %s379
        // Predicated region
        $region60: #{graphsage0tpk_forward.4} parent=58 // pred_check
          %p381 = pneg %p51
        $region61: #{graphsage0tpk_forward.4} parent=58 // pred_check_branch
          %383 = sbr.rel (%p381) target = $region63
        $region62: #{graphsage0tpk_forward.4} parent=58 // pred_region
          _
        $region63: #{graphsage0tpk_forward.4} parent=58 // pred_fallthru
          _
        %s384 = sand.u32 %s38, 1
        %s385 = sand.u32 %s38, 1
        %s386 = smul.addr %s385, 512
        %s387 = scalar_lea.vmem [#allocation3], %s386
        %p388 = pneg %p51
        %p389 = pneg %p48
        %s390 = smul.u32 32, %s21
        %p391 = scmp.lt.s32.totalorder %s390, 63
        %s392 = scalar_select %p391, %s390, 63
        %s393 = smul.addr %s392, 8
        %s394 = scalar_lea.vmem %s1, %s393
        %p395 = pneg %p77
        %p396 = pneg %p74
        %s397 = smul.u32 32, %s20
        %p398 = scmp.lt.s32.totalorder %s397, 63
        %s399 = scalar_select %p398, %s397, 63
        %s400 = smul.addr %s399, 8
        %s401 = scalar_lea.vmem %s2, %s400
        %p402 = pneg %p103
        %p403 = pneg %p100
        %p404 = pneg %p124
        %p405 = pneg %p121
        %p406 = pneg %p145
        %p407 = pneg %p142
        %p408 = pneg %p171
        %p409 = pneg %p168
        %s410 = smul.u32 32, %s20
        %p411 = scmp.lt.s32.totalorder %s410, 63
        %s412 = scalar_select %p411, %s410, 63
        %s413 = smul.addr %s412, 8
        %s414 = scalar_lea.vmem %s5, %s413
        %s415 = smul.u32 32, %s20
        %s416 = smul.u32 2, %s21
        %s417 = smul.u32 32, %s21
        %p418 = scmp.lt.s32.totalorder %s417, 63
        %s419 = scalar_select %p418, %s417, 63
        %s420 = smul.addr %s419, 8
        %s421 = scalar_lea.vmem %s1, %s420
        %s422 = smul.u32 32, %s21
        %s423 = smul.u32 32, %s20
        %p424 = scmp.lt.s32.totalorder %s423, 63
        %s425 = scalar_select %p424, %s423, 63
        %s426 = smul.addr %s425, 8
        %s427 = scalar_lea.vmem %s2, %s426
        %s428 = smul.u32 32, %s20
        %s429 = smul.u32 32, %s20
        %p430 = scmp.lt.s32.totalorder %s429, 63
        %s431 = scalar_select %p430, %s429, 63
        %s432 = smul.addr %s431, 8
        %s433 = scalar_lea.vmem %s5, %s432
        %s434 = smul.u32 32, %s20
        %p436 = scmp.eq.s32.totalorder %s21, 0
        // Predicated region
        $region64: #{graphsage0tpk_forward.4} parent=58 // pred_check
          %p437 = pneg %p436
        $region65: #{graphsage0tpk_forward.4} parent=58 // pred_check_branch
          %439 = sbr.rel (%p437) target = $region67
        $region66: #{graphsage0tpk_forward.4} parent=58 // pred_region
          %440 = vst [vmem:[#allocation2] sm:$0xff] 0.0
          %441 = vst [vmem:[#allocation2 + $0x8] sm:$0xff] 0.0
          %442 = vst [vmem:[#allocation2 + $0x10] sm:$0xff] 0.0
          %443 = vst [vmem:[#allocation2 + $0x18] sm:$0xff] 0.0
          %444 = vst [vmem:[#allocation2 + $0x20] sm:$0xff] 0.0
          %445 = vst [vmem:[#allocation2 + $0x28] sm:$0xff] 0.0
          %446 = vst [vmem:[#allocation2 + $0x30] sm:$0xff] 0.0
          %447 = vst [vmem:[#allocation2 + $0x38] sm:$0xff] 0.0
          %448 = vst [vmem:[#allocation2 + $0x40] sm:$0xff] 0.0
          %449 = vst [vmem:[#allocation2 + $0x48] sm:$0xff] 0.0
          %450 = vst [vmem:[#allocation2 + $0x50] sm:$0xff] 0.0
          %451 = vst [vmem:[#allocation2 + $0x58] sm:$0xff] 0.0
          %452 = vst [vmem:[#allocation2 + $0x60] sm:$0xff] 0.0
          %453 = vst [vmem:[#allocation2 + $0x68] sm:$0xff] 0.0
          %454 = vst [vmem:[#allocation2 + $0x70] sm:$0xff] 0.0
          %455 = vst [vmem:[#allocation2 + $0x78] sm:$0xff] 0.0
          %456 = vst [vmem:[#allocation2 + $0x80] sm:$0xff] 0.0
          %457 = vst [vmem:[#allocation2 + $0x88] sm:$0xff] 0.0
          %458 = vst [vmem:[#allocation2 + $0x90] sm:$0xff] 0.0
          %459 = vst [vmem:[#allocation2 + $0x98] sm:$0xff] 0.0
          %460 = vst [vmem:[#allocation2 + $0xa0] sm:$0xff] 0.0
          %461 = vst [vmem:[#allocation2 + $0xa8] sm:$0xff] 0.0
          %462 = vst [vmem:[#allocation2 + $0xb0] sm:$0xff] 0.0
          %463 = vst [vmem:[#allocation2 + $0xb8] sm:$0xff] 0.0
          %464 = vst [vmem:[#allocation2 + $0xc0] sm:$0xff] 0.0
          %465 = vst [vmem:[#allocation2 + $0xc8] sm:$0xff] 0.0
          %466 = vst [vmem:[#allocation2 + $0xd0] sm:$0xff] 0.0
          %467 = vst [vmem:[#allocation2 + $0xd8] sm:$0xff] 0.0
          %468 = vst [vmem:[#allocation2 + $0xe0] sm:$0xff] 0.0
          %469 = vst [vmem:[#allocation2 + $0xe8] sm:$0xff] 0.0
          %470 = vst [vmem:[#allocation2 + $0xf0] sm:$0xff] 0.0
          %471 = vst [vmem:[#allocation2 + $0xf8] sm:$0xff] 0.0
        $region67: #{graphsage0tpk_forward.4} parent=58 // pred_fallthru
          _
        %v472 = vld [vmem:[#allocation2] sm:$0xff]
        %v473 = vld [vmem:[#allocation2 + $0x8] sm:$0xff]
        %v474 = vld [vmem:[#allocation2 + $0x10] sm:$0xff]
        %v475 = vld [vmem:[#allocation2 + $0x18] sm:$0xff]
        %v476 = vld [vmem:[#allocation2 + $0x20] sm:$0xff]
        %v477 = vld [vmem:[#allocation2 + $0x28] sm:$0xff]
        %v478 = vld [vmem:[#allocation2 + $0x30] sm:$0xff]
        %v479 = vld [vmem:[#allocation2 + $0x38] sm:$0xff]
        %v480 = vld [vmem:[#allocation2 + $0x40] sm:$0xff]
        %v481 = vld [vmem:[#allocation2 + $0x48] sm:$0xff]
        %v482 = vld [vmem:[#allocation2 + $0x50] sm:$0xff]
        %v483 = vld [vmem:[#allocation2 + $0x58] sm:$0xff]
        %v484 = vld [vmem:[#allocation2 + $0x60] sm:$0xff]
        %v485 = vld [vmem:[#allocation2 + $0x68] sm:$0xff]
        %v486 = vld [vmem:[#allocation2 + $0x70] sm:$0xff]
        %v487 = vld [vmem:[#allocation2 + $0x78] sm:$0xff]
        %v488 = vld [vmem:[#allocation2 + $0x80] sm:$0xff]
        %v489 = vld [vmem:[#allocation2 + $0x88] sm:$0xff]
        %v490 = vld [vmem:[#allocation2 + $0x90] sm:$0xff]
        %v491 = vld [vmem:[#allocation2 + $0x98] sm:$0xff]
        %v492 = vld [vmem:[#allocation2 + $0xa0] sm:$0xff]
        %v493 = vld [vmem:[#allocation2 + $0xa8] sm:$0xff]
        %v494 = vld [vmem:[#allocation2 + $0xb0] sm:$0xff]
        %v495 = vld [vmem:[#allocation2 + $0xb8] sm:$0xff]
        %v496 = vld [vmem:[#allocation2 + $0xc0] sm:$0xff]
        %v497 = vld [vmem:[#allocation2 + $0xc8] sm:$0xff]
        %v498 = vld [vmem:[#allocation2 + $0xd0] sm:$0xff]
        %v499 = vld [vmem:[#allocation2 + $0xd8] sm:$0xff]
        %v500 = vld [vmem:[#allocation2 + $0xe0] sm:$0xff]
        %v501 = vld [vmem:[#allocation2 + $0xe8] sm:$0xff]
        %v502 = vld [vmem:[#allocation2 + $0xf0] sm:$0xff]
        %v503 = vld [vmem:[#allocation2 + $0xf8] sm:$0xff]
        %v504 = vld [vmem:[%s380] sm:$0xff]
        %v505 = vld [vmem:[%s380 + $0x8] sm:$0xff]
        %v506 = vld [vmem:[%s380 + $0x10] sm:$0xff]
        %v507 = vld [vmem:[%s380 + $0x18] sm:$0xff]
        %v508 = vld [vmem:[%s380 + $0x20] sm:$0xff]
        %v509 = vld [vmem:[%s380 + $0x28] sm:$0xff]
        %v510 = vld [vmem:[%s380 + $0x30] sm:$0xff]
        %v511 = vld [vmem:[%s380 + $0x38] sm:$0xff]
        %v512 = vld [vmem:[%s380 + $0x40] sm:$0xff]
        %v513 = vld [vmem:[%s380 + $0x48] sm:$0xff]
        %v514 = vld [vmem:[%s380 + $0x50] sm:$0xff]
        %v515 = vld [vmem:[%s380 + $0x58] sm:$0xff]
        %v516 = vld [vmem:[%s380 + $0x60] sm:$0xff]
        %v517 = vld [vmem:[%s380 + $0x68] sm:$0xff]
        %v518 = vld [vmem:[%s380 + $0x70] sm:$0xff]
        %v519 = vld [vmem:[%s380 + $0x78] sm:$0xff]
        %v520 = vld [vmem:[%s380 + $0x80] sm:$0xff]
        %v521 = vld [vmem:[%s380 + $0x88] sm:$0xff]
        %v522 = vld [vmem:[%s380 + $0x90] sm:$0xff]
        %v523 = vld [vmem:[%s380 + $0x98] sm:$0xff]
        %v524 = vld [vmem:[%s380 + $0xa0] sm:$0xff]
        %v525 = vld [vmem:[%s380 + $0xa8] sm:$0xff]
        %v526 = vld [vmem:[%s380 + $0xb0] sm:$0xff]
        %v527 = vld [vmem:[%s380 + $0xb8] sm:$0xff]
        %v528 = vld [vmem:[%s380 + $0xc0] sm:$0xff]
        %v529 = vld [vmem:[%s380 + $0xc8] sm:$0xff]
        %v530 = vld [vmem:[%s380 + $0xd0] sm:$0xff]
        %v531 = vld [vmem:[%s380 + $0xd8] sm:$0xff]
        %v532 = vld [vmem:[%s380 + $0xe0] sm:$0xff]
        %v533 = vld [vmem:[%s380 + $0xe8] sm:$0xff]
        %v534 = vld [vmem:[%s380 + $0xf0] sm:$0xff]
        %v535 = vld [vmem:[%s380 + $0xf8] sm:$0xff]
        %v536 = vld [vmem:[%s380 + $0x100] sm:$0xff]
        %v537 = vld [vmem:[%s380 + $0x108] sm:$0xff]
        %v538 = vld [vmem:[%s380 + $0x110] sm:$0xff]
        %v539 = vld [vmem:[%s380 + $0x118] sm:$0xff]
        %v540 = vld [vmem:[%s380 + $0x120] sm:$0xff]
        %v541 = vld [vmem:[%s380 + $0x128] sm:$0xff]
        %v542 = vld [vmem:[%s380 + $0x130] sm:$0xff]
        %v543 = vld [vmem:[%s380 + $0x138] sm:$0xff]
        %v544 = vld [vmem:[%s380 + $0x140] sm:$0xff]
        %v545 = vld [vmem:[%s380 + $0x148] sm:$0xff]
        %v546 = vld [vmem:[%s380 + $0x150] sm:$0xff]
        %v547 = vld [vmem:[%s380 + $0x158] sm:$0xff]
        %v548 = vld [vmem:[%s380 + $0x160] sm:$0xff]
        %v549 = vld [vmem:[%s380 + $0x168] sm:$0xff]
        %v550 = vld [vmem:[%s380 + $0x170] sm:$0xff]
        %v551 = vld [vmem:[%s380 + $0x178] sm:$0xff]
        %v552 = vld [vmem:[%s380 + $0x180] sm:$0xff]
        %v553 = vld [vmem:[%s380 + $0x188] sm:$0xff]
        %v554 = vld [vmem:[%s380 + $0x190] sm:$0xff]
        %v555 = vld [vmem:[%s380 + $0x198] sm:$0xff]
        %v556 = vld [vmem:[%s380 + $0x1a0] sm:$0xff]
        %v557 = vld [vmem:[%s380 + $0x1a8] sm:$0xff]
        %v558 = vld [vmem:[%s380 + $0x1b0] sm:$0xff]
        %v559 = vld [vmem:[%s380 + $0x1b8] sm:$0xff]
        %v560 = vld [vmem:[%s380 + $0x1c0] sm:$0xff]
        %v561 = vld [vmem:[%s380 + $0x1c8] sm:$0xff]
        %v562 = vld [vmem:[%s380 + $0x1d0] sm:$0xff]
        %v563 = vld [vmem:[%s380 + $0x1d8] sm:$0xff]
        %v564 = vld [vmem:[%s380 + $0x1e0] sm:$0xff]
        %v565 = vld [vmem:[%s380 + $0x1e8] sm:$0xff]
        %v566 = vld [vmem:[%s380 + $0x1f0] sm:$0xff]
        %v567 = vld [vmem:[%s380 + $0x1f8] sm:$0xff]
        %v568 = vld [vmem:[%s421] sm:$0xff]
        %v569 = vld [vmem:[%s421 + $0x8] sm:$0xff]
        %v570 = vld [vmem:[%s421 + $0x10] sm:$0xff]
        %v571 = vld [vmem:[%s421 + $0x18] sm:$0xff]
        %v572 = vld [vmem:[%s421 + $0x20] sm:$0xff]
        %v573 = vld [vmem:[%s421 + $0x28] sm:$0xff]
        %v574 = vld [vmem:[%s421 + $0x30] sm:$0xff]
        %v575 = vld [vmem:[%s421 + $0x38] sm:$0xff]
        %v576 = vld [vmem:[%s421 + $0x40] sm:$0xff]
        %v577 = vld [vmem:[%s421 + $0x48] sm:$0xff]
        %v578 = vld [vmem:[%s421 + $0x50] sm:$0xff]
        %v579 = vld [vmem:[%s421 + $0x58] sm:$0xff]
        %v580 = vld [vmem:[%s421 + $0x60] sm:$0xff]
        %v581 = vld [vmem:[%s421 + $0x68] sm:$0xff]
        %v582 = vld [vmem:[%s421 + $0x70] sm:$0xff]
        %v583 = vld [vmem:[%s421 + $0x78] sm:$0xff]
        %v584 = vld [vmem:[%s421 + $0x80] sm:$0xff]
        %v585 = vld [vmem:[%s421 + $0x88] sm:$0xff]
        %v586 = vld [vmem:[%s421 + $0x90] sm:$0xff]
        %v587 = vld [vmem:[%s421 + $0x98] sm:$0xff]
        %v588 = vld [vmem:[%s421 + $0xa0] sm:$0xff]
        %v589 = vld [vmem:[%s421 + $0xa8] sm:$0xff]
        %v590 = vld [vmem:[%s421 + $0xb0] sm:$0xff]
        %v591 = vld [vmem:[%s421 + $0xb8] sm:$0xff]
        %v592 = vld [vmem:[%s421 + $0xc0] sm:$0xff]
        %v593 = vld [vmem:[%s421 + $0xc8] sm:$0xff]
        %v594 = vld [vmem:[%s421 + $0xd0] sm:$0xff]
        %v595 = vld [vmem:[%s421 + $0xd8] sm:$0xff]
        %v596 = vld [vmem:[%s421 + $0xe0] sm:$0xff]
        %v597 = vld [vmem:[%s421 + $0xe8] sm:$0xff]
        %v598 = vld [vmem:[%s421 + $0xf0] sm:$0xff]
        %v599 = vld [vmem:[%s421 + $0xf8] sm:$0xff]
        %600 = vmatprep.subr.mxu0 0.0
        %601 = vmatpush1.msra.mxu0 %v568
        %602 = vmatprep.subr.mxu0 0.0
        %603 = vmatpush1.msra.mxu0 %v569
        %604 = vmatprep.subr.mxu0 0.0
        %605 = vmatpush1.msra.mxu0 %v570
        %606 = vmatprep.subr.mxu0 0.0
        %607 = vmatpush1.msra.mxu0 %v571
        %608 = vmatprep.subr.mxu0 0.0
        %609 = vmatpush1.msra.mxu0 %v572
        %610 = vmatprep.subr.mxu0 0.0
        %611 = vmatpush1.msra.mxu0 %v573
        %612 = vmatprep.subr.mxu0 0.0
        %613 = vmatpush1.msra.mxu0 %v574
        %614 = vmatprep.subr.mxu0 0.0
        %615 = vmatpush1.msra.mxu0 %v575
        %616 = vmatprep.subr.mxu0 0.0
        %617 = vmatpush1.msra.mxu0 %v576
        %618 = vmatprep.subr.mxu0 0.0
        %619 = vmatpush1.msra.mxu0 %v577
        %620 = vmatprep.subr.mxu0 0.0
        %621 = vmatpush1.msra.mxu0 %v578
        %622 = vmatprep.subr.mxu0 0.0
        %623 = vmatpush1.msra.mxu0 %v579
        %624 = vmatprep.subr.mxu0 0.0
        %625 = vmatpush1.msra.mxu0 %v580
        %626 = vmatprep.subr.mxu0 0.0
        %627 = vmatpush1.msra.mxu0 %v581
        %628 = vmatprep.subr.mxu0 0.0
        %629 = vmatpush1.msra.mxu0 %v582
        %630 = vmatprep.subr.mxu0 0.0
        %631 = vmatpush1.msra.mxu0 %v583
        %632 = vmatprep.subr.mxu0 0.0
        %633 = vmatpush1.msra.mxu0 %v584
        %634 = vmatprep.subr.mxu0 0.0
        %635 = vmatpush1.msra.mxu0 %v585
        %636 = vmatprep.subr.mxu0 0.0
        %637 = vmatpush1.msra.mxu0 %v586
        %638 = vmatprep.subr.mxu0 0.0
        %639 = vmatpush1.msra.mxu0 %v587
        %640 = vmatprep.subr.mxu0 0.0
        %641 = vmatpush1.msra.mxu0 %v588
        %642 = vmatprep.subr.mxu0 0.0
        %643 = vmatpush1.msra.mxu0 %v589
        %644 = vmatprep.subr.mxu0 0.0
        %645 = vmatpush1.msra.mxu0 %v590
        %646 = vmatprep.subr.mxu0 0.0
        %647 = vmatpush1.msra.mxu0 %v591
        %648 = vmatprep.subr.mxu0 0.0
        %649 = vmatpush1.msra.mxu0 %v592
        %650 = vmatprep.subr.mxu0 0.0
        %651 = vmatpush1.msra.mxu0 %v593
        %652 = vmatprep.subr.mxu0 0.0
        %653 = vmatpush1.msra.mxu0 %v594
        %654 = vmatprep.subr.mxu0 0.0
        %655 = vmatpush1.msra.mxu0 %v595
        %656 = vmatprep.subr.mxu0 0.0
        %657 = vmatpush1.msra.mxu0 %v596
        %658 = vmatprep.subr.mxu0 0.0
        %659 = vmatpush1.msra.mxu0 %v597
        %660 = vmatprep.subr.mxu0 0.0
        %661 = vmatpush1.msra.mxu0 %v598
        %662 = vmatprep.subr.mxu0 0.0
        %663 = vmatpush1.msra.mxu0 %v599
        %664 = vmatprep.mubr.f32.mxu0 %v505
        %665 = vmatmul.mubr.f32.gmra.mrb[0].mxu0 %v504
        %v666 = vpop.f32.mrb[0].mxu0
        %v667 = vadd.f32 0.0, %v666
        %v668 = vpop.f32.mrb[0].mxu0
        %669 = vmatprep.mubr.f32.mxu0 %v507
        %670 = vmatmul.mubr.f32.gmra.mrb[0].mxu0 %v506
        %v671 = vpop.f32.mrb[0].mxu0
        %v672 = vadd.f32 0.0, %v671
        %v673 = vpop.f32.mrb[0].mxu0
        %674 = vmatprep.mubr.f32.mxu0 %v509
        %675 = vmatmul.mubr.f32.gmra.mrb[0].mxu0 %v508
        %v676 = vpop.f32.mrb[0].mxu0
        %v677 = vadd.f32 0.0, %v676
        %v678 = vpop.f32.mrb[0].mxu0
        %679 = vmatprep.mubr.f32.mxu0 %v511
        %680 = vmatmul.mubr.f32.gmra.mrb[0].mxu0 %v510
        %v681 = vpop.f32.mrb[0].mxu0
        %v682 = vadd.f32 0.0, %v681
        %v683 = vpop.f32.mrb[0].mxu0
        %684 = vmatprep.mubr.f32.mxu0 %v513
        %685 = vmatmul.mubr.f32.gmra.mrb[0].mxu0 %v512
        %v686 = vpop.f32.mrb[0].mxu0
        %v687 = vadd.f32 0.0, %v686
        %v688 = vpop.f32.mrb[0].mxu0
        %689 = vmatprep.mubr.f32.mxu0 %v515
        %690 = vmatmul.mubr.f32.gmra.mrb[0].mxu0 %v514
        %v691 = vpop.f32.mrb[0].mxu0
        %v692 = vadd.f32 0.0, %v691
        %v693 = vpop.f32.mrb[0].mxu0
        %694 = vmatprep.mubr.f32.mxu0 %v517
        %695 = vmatmul.mubr.f32.gmra.mrb[0].mxu0 %v516
        %v696 = vpop.f32.mrb[0].mxu0
        %v697 = vadd.f32 0.0, %v696
        %v698 = vpop.f32.mrb[0].mxu0
        %699 = vmatprep.mubr.f32.mxu0 %v519
        %700 = vmatmul.mubr.f32.gmra.mrb[0].mxu0 %v518
        %v701 = vpop.f32.mrb[0].mxu0
        %v702 = vadd.f32 0.0, %v701
        %v703 = vpop.f32.mrb[0].mxu0
        %704 = vmatprep.mubr.f32.mxu0 %v521
        %705 = vmatmul.mubr.f32.gmra.mrb[0].mxu0 %v520
        %v706 = vpop.f32.mrb[0].mxu0
        %v707 = vadd.f32 0.0, %v706
        %v708 = vpop.f32.mrb[0].mxu0
        %709 = vmatprep.mubr.f32.mxu0 %v523
        %710 = vmatmul.mubr.f32.gmra.mrb[0].mxu0 %v522
        %v711 = vpop.f32.mrb[0].mxu0
        %v712 = vadd.f32 0.0, %v711
        %v713 = vpop.f32.mrb[0].mxu0
        %714 = vmatprep.mubr.f32.mxu0 %v525
        %715 = vmatmul.mubr.f32.gmra.mrb[0].mxu0 %v524
        %v716 = vpop.f32.mrb[0].mxu0
        %v717 = vadd.f32 0.0, %v716
        %v718 = vpop.f32.mrb[0].mxu0
        %719 = vmatprep.mubr.f32.mxu0 %v527
        %720 = vmatmul.mubr.f32.gmra.mrb[0].mxu0 %v526
        %v721 = vpop.f32.mrb[0].mxu0
        %v722 = vadd.f32 0.0, %v721
        %v723 = vpop.f32.mrb[0].mxu0
        %724 = vmatprep.mubr.f32.mxu0 %v529
        %725 = vmatmul.mubr.f32.gmra.mrb[0].mxu0 %v528
        %v726 = vpop.f32.mrb[0].mxu0
        %v727 = vadd.f32 0.0, %v726
        %v728 = vpop.f32.mrb[0].mxu0
        %729 = vmatprep.mubr.f32.mxu0 %v531
        %730 = vmatmul.mubr.f32.gmra.mrb[0].mxu0 %v530
        %v731 = vpop.f32.mrb[0].mxu0
        %v732 = vadd.f32 0.0, %v731
        %v733 = vpop.f32.mrb[0].mxu0
        %734 = vmatprep.mubr.f32.mxu0 %v533
        %735 = vmatmul.mubr.f32.gmra.mrb[0].mxu0 %v532
        %v736 = vpop.f32.mrb[0].mxu0
        %v737 = vadd.f32 0.0, %v736
        %v738 = vpop.f32.mrb[0].mxu0
        %739 = vmatprep.mubr.f32.mxu0 %v535
        %740 = vmatmul.mubr.f32.gmra.mrb[0].mxu0 %v534
        %v741 = vpop.f32.mrb[0].mxu0
        %v742 = vadd.f32 0.0, %v741
        %v743 = vpop.f32.mrb[0].mxu0
        %744 = vmatprep.mubr.f32.mxu0 %v537
        %745 = vmatmul.mubr.f32.gmra.mrb[0].mxu0 %v536
        %v746 = vpop.f32.mrb[0].mxu0
        %v747 = vadd.f32 0.0, %v746
        %v748 = vpop.f32.mrb[0].mxu0
        %749 = vmatprep.mubr.f32.mxu0 %v539
        %750 = vmatmul.mubr.f32.gmra.mrb[0].mxu0 %v538
        %v751 = vpop.f32.mrb[0].mxu0
        %v752 = vadd.f32 0.0, %v751
        %v753 = vpop.f32.mrb[0].mxu0
        %754 = vmatprep.mubr.f32.mxu0 %v541
        %755 = vmatmul.mubr.f32.gmra.mrb[0].mxu0 %v540
        %v756 = vpop.f32.mrb[0].mxu0
        %v757 = vadd.f32 0.0, %v756
        %v758 = vpop.f32.mrb[0].mxu0
        %759 = vmatprep.mubr.f32.mxu0 %v543
        %760 = vmatmul.mubr.f32.gmra.mrb[0].mxu0 %v542
        %v761 = vpop.f32.mrb[0].mxu0
        %v762 = vadd.f32 0.0, %v761
        %v763 = vpop.f32.mrb[0].mxu0
        %764 = vmatprep.mubr.f32.mxu0 %v545
        %765 = vmatmul.mubr.f32.gmra.mrb[0].mxu0 %v544
        %v766 = vpop.f32.mrb[0].mxu0
        %v767 = vadd.f32 0.0, %v766
        %v768 = vpop.f32.mrb[0].mxu0
        %769 = vmatprep.mubr.f32.mxu0 %v547
        %770 = vmatmul.mubr.f32.gmra.mrb[0].mxu0 %v546
        %v771 = vpop.f32.mrb[0].mxu0
        %v772 = vadd.f32 0.0, %v771
        %v773 = vpop.f32.mrb[0].mxu0
        %774 = vmatprep.mubr.f32.mxu0 %v549
        %775 = vmatmul.mubr.f32.gmra.mrb[0].mxu0 %v548
        %v776 = vpop.f32.mrb[0].mxu0
        %v777 = vadd.f32 0.0, %v776
        %v778 = vpop.f32.mrb[0].mxu0
        %779 = vmatprep.mubr.f32.mxu0 %v551
        %780 = vmatmul.mubr.f32.gmra.mrb[0].mxu0 %v550
        %v781 = vpop.f32.mrb[0].mxu0
        %v782 = vadd.f32 0.0, %v781
        %v783 = vpop.f32.mrb[0].mxu0
        %784 = vmatprep.mubr.f32.mxu0 %v553
        %785 = vmatmul.mubr.f32.gmra.mrb[0].mxu0 %v552
        %v786 = vpop.f32.mrb[0].mxu0
        %v787 = vadd.f32 0.0, %v786
        %v788 = vpop.f32.mrb[0].mxu0
        %789 = vmatprep.mubr.f32.mxu0 %v555
        %790 = vmatmul.mubr.f32.gmra.mrb[0].mxu0 %v554
        %v791 = vpop.f32.mrb[0].mxu0
        %v792 = vadd.f32 0.0, %v791
        %v793 = vpop.f32.mrb[0].mxu0
        %794 = vmatprep.mubr.f32.mxu0 %v557
        %795 = vmatmul.mubr.f32.gmra.mrb[0].mxu0 %v556
        %v796 = vpop.f32.mrb[0].mxu0
        %v797 = vadd.f32 0.0, %v796
        %v798 = vpop.f32.mrb[0].mxu0
        %799 = vmatprep.mubr.f32.mxu0 %v559
        %800 = vmatmul.mubr.f32.gmra.mrb[0].mxu0 %v558
        %v801 = vpop.f32.mrb[0].mxu0
        %v802 = vadd.f32 0.0, %v801
        %v803 = vpop.f32.mrb[0].mxu0
        %804 = vmatprep.mubr.f32.mxu0 %v561
        %805 = vmatmul.mubr.f32.gmra.mrb[0].mxu0 %v560
        %v806 = vpop.f32.mrb[0].mxu0
        %v807 = vadd.f32 0.0, %v806
        %v808 = vpop.f32.mrb[0].mxu0
        %809 = vmatprep.mubr.f32.mxu0 %v563
        %810 = vmatmul.mubr.f32.gmra.mrb[0].mxu0 %v562
        %v811 = vpop.f32.mrb[0].mxu0
        %v812 = vadd.f32 0.0, %v811
        %v813 = vpop.f32.mrb[0].mxu0
        %814 = vmatprep.mubr.f32.mxu0 %v565
        %815 = vmatmul.mubr.f32.gmra.mrb[0].mxu0 %v564
        %v816 = vpop.f32.mrb[0].mxu0
        %v817 = vadd.f32 0.0, %v816
        %v818 = vpop.f32.mrb[0].mxu0
        %819 = vmatprep.mubr.f32.mxu0 %v567
        %820 = vmatmul.mubr.f32.gmra.mrb[0].mxu0 %v566
        %v821 = vpop.f32.mrb[0].mxu0
        %v822 = vadd.f32 0.0, %v821
        %v823 = vpop.f32.mrb[0].mxu0
        %824 = vdwg.mxu0
        %v825 = vadd.f32 %v472, %v667
        %v826 = vadd.f32 %v473, %v672
        %v827 = vadd.f32 %v474, %v677
        %v828 = vadd.f32 %v475, %v682
        %v829 = vadd.f32 %v476, %v687
        %v830 = vadd.f32 %v477, %v692
        %v831 = vadd.f32 %v478, %v697
        %v832 = vadd.f32 %v479, %v702
        %v833 = vadd.f32 %v480, %v707
        %v834 = vadd.f32 %v481, %v712
        %v835 = vadd.f32 %v482, %v717
        %v836 = vadd.f32 %v483, %v722
        %v837 = vadd.f32 %v484, %v727
        %v838 = vadd.f32 %v485, %v732
        %v839 = vadd.f32 %v486, %v737
        %v840 = vadd.f32 %v487, %v742
        %v841 = vadd.f32 %v488, %v747
        %v842 = vadd.f32 %v489, %v752
        %v843 = vadd.f32 %v490, %v757
        %v844 = vadd.f32 %v491, %v762
        %v845 = vadd.f32 %v492, %v767
        %v846 = vadd.f32 %v493, %v772
        %v847 = vadd.f32 %v494, %v777
        %v848 = vadd.f32 %v495, %v782
        %v849 = vadd.f32 %v496, %v787
        %v850 = vadd.f32 %v497, %v792
        %v851 = vadd.f32 %v498, %v797
        %v852 = vadd.f32 %v499, %v802
        %v853 = vadd.f32 %v500, %v807
        %v854 = vadd.f32 %v501, %v812
        %v855 = vadd.f32 %v502, %v817
        %v856 = vadd.f32 %v503, %v822
        %857 = vst [vmem:[#allocation2] sm:$0xff] %v825
        %858 = vst [vmem:[#allocation2 + $0x8] sm:$0xff] %v826
        %859 = vst [vmem:[#allocation2 + $0x10] sm:$0xff] %v827
        %860 = vst [vmem:[#allocation2 + $0x18] sm:$0xff] %v828
        %861 = vst [vmem:[#allocation2 + $0x20] sm:$0xff] %v829
        %862 = vst [vmem:[#allocation2 + $0x28] sm:$0xff] %v830
        %863 = vst [vmem:[#allocation2 + $0x30] sm:$0xff] %v831
        %864 = vst [vmem:[#allocation2 + $0x38] sm:$0xff] %v832
        %865 = vst [vmem:[#allocation2 + $0x40] sm:$0xff] %v833
        %866 = vst [vmem:[#allocation2 + $0x48] sm:$0xff] %v834
        %867 = vst [vmem:[#allocation2 + $0x50] sm:$0xff] %v835
        %868 = vst [vmem:[#allocation2 + $0x58] sm:$0xff] %v836
        %869 = vst [vmem:[#allocation2 + $0x60] sm:$0xff] %v837
        %870 = vst [vmem:[#allocation2 + $0x68] sm:$0xff] %v838
        %871 = vst [vmem:[#allocation2 + $0x70] sm:$0xff] %v839
        %872 = vst [vmem:[#allocation2 + $0x78] sm:$0xff] %v840
        %873 = vst [vmem:[#allocation2 + $0x80] sm:$0xff] %v841
        %874 = vst [vmem:[#allocation2 + $0x88] sm:$0xff] %v842
        %875 = vst [vmem:[#allocation2 + $0x90] sm:$0xff] %v843
        %876 = vst [vmem:[#allocation2 + $0x98] sm:$0xff] %v844
        %877 = vst [vmem:[#allocation2 + $0xa0] sm:$0xff] %v845
        %878 = vst [vmem:[#allocation2 + $0xa8] sm:$0xff] %v846
        %879 = vst [vmem:[#allocation2 + $0xb0] sm:$0xff] %v847
        %880 = vst [vmem:[#allocation2 + $0xb8] sm:$0xff] %v848
        %881 = vst [vmem:[#allocation2 + $0xc0] sm:$0xff] %v849
        %882 = vst [vmem:[#allocation2 + $0xc8] sm:$0xff] %v850
        %883 = vst [vmem:[#allocation2 + $0xd0] sm:$0xff] %v851
        %884 = vst [vmem:[#allocation2 + $0xd8] sm:$0xff] %v852
        %885 = vst [vmem:[#allocation2 + $0xe0] sm:$0xff] %v853
        %886 = vst [vmem:[#allocation2 + $0xe8] sm:$0xff] %v854
        %887 = vst [vmem:[#allocation2 + $0xf0] sm:$0xff] %v855
        %888 = vst [vmem:[#allocation2 + $0xf8] sm:$0xff] %v856
        %p889 = scmp.eq.s32.totalorder %s21, 1
        // Predicated region
        $region68: #{graphsage0tpk_forward.4} parent=58 // pred_check
          %p890 = pneg %p889
        $region69: #{graphsage0tpk_forward.4} parent=58 // pred_check_branch
          %892 = sbr.rel (%p890) target = $region71
        $region70: #{graphsage0tpk_forward.4} parent=58 // pred_region
          %v893 = vld [vmem:[#allocation2] sm:$0xff]
          %v894 = vld [vmem:[#allocation2 + $0x8] sm:$0xff]
          %v895 = vld [vmem:[#allocation2 + $0x10] sm:$0xff]
          %v896 = vld [vmem:[#allocation2 + $0x18] sm:$0xff]
          %v897 = vld [vmem:[#allocation2 + $0x20] sm:$0xff]
          %v898 = vld [vmem:[#allocation2 + $0x28] sm:$0xff]
          %v899 = vld [vmem:[#allocation2 + $0x30] sm:$0xff]
          %v900 = vld [vmem:[#allocation2 + $0x38] sm:$0xff]
          %v901 = vld [vmem:[#allocation2 + $0x40] sm:$0xff]
          %v902 = vld [vmem:[#allocation2 + $0x48] sm:$0xff]
          %v903 = vld [vmem:[#allocation2 + $0x50] sm:$0xff]
          %v904 = vld [vmem:[#allocation2 + $0x58] sm:$0xff]
          %v905 = vld [vmem:[#allocation2 + $0x60] sm:$0xff]
          %v906 = vld [vmem:[#allocation2 + $0x68] sm:$0xff]
          %v907 = vld [vmem:[#allocation2 + $0x70] sm:$0xff]
          %v908 = vld [vmem:[#allocation2 + $0x78] sm:$0xff]
          %v909 = vld [vmem:[#allocation2 + $0x80] sm:$0xff]
          %v910 = vld [vmem:[#allocation2 + $0x88] sm:$0xff]
          %v911 = vld [vmem:[#allocation2 + $0x90] sm:$0xff]
          %v912 = vld [vmem:[#allocation2 + $0x98] sm:$0xff]
          %v913 = vld [vmem:[#allocation2 + $0xa0] sm:$0xff]
          %v914 = vld [vmem:[#allocation2 + $0xa8] sm:$0xff]
          %v915 = vld [vmem:[#allocation2 + $0xb0] sm:$0xff]
          %v916 = vld [vmem:[#allocation2 + $0xb8] sm:$0xff]
          %v917 = vld [vmem:[#allocation2 + $0xc0] sm:$0xff]
          %v918 = vld [vmem:[#allocation2 + $0xc8] sm:$0xff]
          %v919 = vld [vmem:[#allocation2 + $0xd0] sm:$0xff]
          %v920 = vld [vmem:[#allocation2 + $0xd8] sm:$0xff]
          %v921 = vld [vmem:[#allocation2 + $0xe0] sm:$0xff]
          %v922 = vld [vmem:[#allocation2 + $0xe8] sm:$0xff]
          %v923 = vld [vmem:[#allocation2 + $0xf0] sm:$0xff]
          %v924 = vld [vmem:[#allocation2 + $0xf8] sm:$0xff]
          %v925 = vld [vmem:[%s427] sm:$0xff]
          %v926 = vld [vmem:[%s427 + $0x8] sm:$0xff]
          %v927 = vld [vmem:[%s427 + $0x10] sm:$0xff]
          %v928 = vld [vmem:[%s427 + $0x18] sm:$0xff]
          %v929 = vld [vmem:[%s427 + $0x20] sm:$0xff]
          %v930 = vld [vmem:[%s427 + $0x28] sm:$0xff]
          %v931 = vld [vmem:[%s427 + $0x30] sm:$0xff]
          %v932 = vld [vmem:[%s427 + $0x38] sm:$0xff]
          %v933 = vld [vmem:[%s427 + $0x40] sm:$0xff]
          %v934 = vld [vmem:[%s427 + $0x48] sm:$0xff]
          %v935 = vld [vmem:[%s427 + $0x50] sm:$0xff]
          %v936 = vld [vmem:[%s427 + $0x58] sm:$0xff]
          %v937 = vld [vmem:[%s427 + $0x60] sm:$0xff]
          %v938 = vld [vmem:[%s427 + $0x68] sm:$0xff]
          %v939 = vld [vmem:[%s427 + $0x70] sm:$0xff]
          %v940 = vld [vmem:[%s427 + $0x78] sm:$0xff]
          %v941 = vld [vmem:[%s427 + $0x80] sm:$0xff]
          %v942 = vld [vmem:[%s427 + $0x88] sm:$0xff]
          %v943 = vld [vmem:[%s427 + $0x90] sm:$0xff]
          %v944 = vld [vmem:[%s427 + $0x98] sm:$0xff]
          %v945 = vld [vmem:[%s427 + $0xa0] sm:$0xff]
          %v946 = vld [vmem:[%s427 + $0xa8] sm:$0xff]
          %v947 = vld [vmem:[%s427 + $0xb0] sm:$0xff]
          %v948 = vld [vmem:[%s427 + $0xb8] sm:$0xff]
          %v949 = vld [vmem:[%s427 + $0xc0] sm:$0xff]
          %v950 = vld [vmem:[%s427 + $0xc8] sm:$0xff]
          %v951 = vld [vmem:[%s427 + $0xd0] sm:$0xff]
          %v952 = vld [vmem:[%s427 + $0xd8] sm:$0xff]
          %v953 = vld [vmem:[%s427 + $0xe0] sm:$0xff]
          %v954 = vld [vmem:[%s427 + $0xe8] sm:$0xff]
          %v955 = vld [vmem:[%s427 + $0xf0] sm:$0xff]
          %v956 = vld [vmem:[%s427 + $0xf8] sm:$0xff]
          %v957 = vpack.c.bf16 %v894, %v893
          %v958 = vpack.c.bf16 %v926, %v925
          %v959 = vpack.c.bf16 %v896, %v895
          %v960 = vpack.c.bf16 %v928, %v927
          %v961 = vpack.c.bf16 %v898, %v897
          %v962 = vpack.c.bf16 %v930, %v929
          %v963 = vpack.c.bf16 %v900, %v899
          %v964 = vpack.c.bf16 %v932, %v931
          %v965 = vpack.c.bf16 %v902, %v901
          %v966 = vpack.c.bf16 %v934, %v933
          %v967 = vpack.c.bf16 %v904, %v903
          %v968 = vpack.c.bf16 %v936, %v935
          %v969 = vpack.c.bf16 %v906, %v905
          %v970 = vpack.c.bf16 %v938, %v937
          %v971 = vpack.c.bf16 %v908, %v907
          %v972 = vpack.c.bf16 %v940, %v939
          %v973 = vpack.c.bf16 %v910, %v909
          %v974 = vpack.c.bf16 %v942, %v941
          %v975 = vpack.c.bf16 %v912, %v911
          %v976 = vpack.c.bf16 %v944, %v943
          %v977 = vpack.c.bf16 %v914, %v913
          %v978 = vpack.c.bf16 %v946, %v945
          %v979 = vpack.c.bf16 %v916, %v915
          %v980 = vpack.c.bf16 %v948, %v947
          %v981 = vpack.c.bf16 %v918, %v917
          %v982 = vpack.c.bf16 %v950, %v949
          %v983 = vpack.c.bf16 %v920, %v919
          %v984 = vpack.c.bf16 %v952, %v951
          %v985 = vpack.c.bf16 %v922, %v921
          %v986 = vpack.c.bf16 %v954, %v953
          %v987 = vpack.c.bf16 %v924, %v923
          %v988 = vpack.c.bf16 %v956, %v955
          %v989 = vld [vmem:[%s3] sm:$0xf]
          %v990 = vld [vmem:[%s3 + $0x4] sm:$0xf]
          %v991 = vld [vmem:[%s3 + $0x8] sm:$0xf]
          %v992 = vld [vmem:[%s3 + $0xc] sm:$0xf]
          %v993 = vld [vmem:[%s3 + $0x10] sm:$0xf]
          %v994 = vld [vmem:[%s3 + $0x14] sm:$0xf]
          %v995 = vld [vmem:[%s3 + $0x18] sm:$0xf]
          %v996 = vld [vmem:[%s3 + $0x1c] sm:$0xf]
          %v997 = vld [vmem:[%s3 + $0x20] sm:$0xf]
          %v998 = vld [vmem:[%s3 + $0x24] sm:$0xf]
          %v999 = vld [vmem:[%s3 + $0x28] sm:$0xf]
          %v1000 = vld [vmem:[%s3 + $0x2c] sm:$0xf]
          %v1001 = vld [vmem:[%s3 + $0x30] sm:$0xf]
          %v1002 = vld [vmem:[%s3 + $0x34] sm:$0xf]
          %v1003 = vld [vmem:[%s3 + $0x38] sm:$0xf]
          %v1004 = vld [vmem:[%s3 + $0x3c] sm:$0xf]
          %v1005 = vld [vmem:[%s3 + $0x40] sm:$0xf]
          %v1006 = vld [vmem:[%s3 + $0x44] sm:$0xf]
          %v1007 = vld [vmem:[%s3 + $0x48] sm:$0xf]
          %v1008 = vld [vmem:[%s3 + $0x4c] sm:$0xf]
          %v1009 = vld [vmem:[%s3 + $0x50] sm:$0xf]
          %v1010 = vld [vmem:[%s3 + $0x54] sm:$0xf]
          %v1011 = vld [vmem:[%s3 + $0x58] sm:$0xf]
          %v1012 = vld [vmem:[%s3 + $0x5c] sm:$0xf]
          %v1013 = vld [vmem:[%s3 + $0x60] sm:$0xf]
          %v1014 = vld [vmem:[%s3 + $0x64] sm:$0xf]
          %v1015 = vld [vmem:[%s3 + $0x68] sm:$0xf]
          %v1016 = vld [vmem:[%s3 + $0x6c] sm:$0xf]
          %v1017 = vld [vmem:[%s3 + $0x70] sm:$0xf]
          %v1018 = vld [vmem:[%s3 + $0x74] sm:$0xf]
          %v1019 = vld [vmem:[%s3 + $0x78] sm:$0xf]
          %v1020 = vld [vmem:[%s3 + $0x7c] sm:$0xf]
          %v1021 = vld [vmem:[%s4] sm:$0x1]
          %v1023 = vlaneseq
          %v1024 = vshrl.u32 %v1023, 7
          %v1025 = vsub.s32 0, %v1024
          %v1026 = vrot.slane %v1021, %v1025
          %v1060 = vunpack.c.l.b16 %v989
          %v1061 = vunpack.c.l.b16 %v990
          %v1062 = vunpack.c.l.b16 %v991
          %v1063 = vunpack.c.l.b16 %v992
          %v1064 = vunpack.c.l.b16 %v993
          %v1065 = vunpack.c.l.b16 %v994
          %v1066 = vunpack.c.l.b16 %v995
          %v1067 = vunpack.c.l.b16 %v996
          %v1068 = vunpack.c.l.b16 %v997
          %v1069 = vunpack.c.l.b16 %v998
          %v1070 = vunpack.c.l.b16 %v999
          %v1071 = vunpack.c.l.b16 %v1000
          %v1072 = vunpack.c.l.b16 %v1001
          %v1073 = vunpack.c.l.b16 %v1002
          %v1074 = vunpack.c.l.b16 %v1003
          %v1075 = vunpack.c.l.b16 %v1004
          %v1076 = vunpack.c.l.b16 %v1005
          %v1077 = vunpack.c.l.b16 %v1006
          %v1078 = vunpack.c.l.b16 %v1007
          %v1079 = vunpack.c.l.b16 %v1008
          %v1080 = vunpack.c.l.b16 %v1009
          %v1081 = vunpack.c.l.b16 %v1010
          %v1082 = vunpack.c.l.b16 %v1011
          %v1083 = vunpack.c.l.b16 %v1012
          %v1084 = vunpack.c.l.b16 %v1013
          %v1085 = vunpack.c.l.b16 %v1014
          %v1086 = vunpack.c.l.b16 %v1015
          %v1087 = vunpack.c.l.b16 %v1016
          %v1088 = vunpack.c.l.b16 %v1017
          %v1089 = vunpack.c.l.b16 %v1018
          %v1090 = vunpack.c.l.b16 %v1019
          %v1091 = vunpack.c.l.b16 %v1020
          %v1092 = vpack.c.b16 %v1061, %v1060
          %v1093 = vpack.c.b16 %v1063, %v1062
          %v1094 = vpack.c.b16 %v1065, %v1064
          %v1095 = vpack.c.b16 %v1067, %v1066
          %v1096 = vpack.c.b16 %v1069, %v1068
          %v1097 = vpack.c.b16 %v1071, %v1070
          %v1098 = vpack.c.b16 %v1073, %v1072
          %v1099 = vpack.c.b16 %v1075, %v1074
          %v1100 = vpack.c.b16 %v1077, %v1076
          %v1101 = vpack.c.b16 %v1079, %v1078
          %v1102 = vpack.c.b16 %v1081, %v1080
          %v1103 = vpack.c.b16 %v1083, %v1082
          %v1104 = vpack.c.b16 %v1085, %v1084
          %v1105 = vpack.c.b16 %v1087, %v1086
          %v1106 = vpack.c.b16 %v1089, %v1088
          %v1107 = vpack.c.b16 %v1091, %v1090
          %1124 = vmatprep.subr.bf16.mxu0 0
          %1125 = vmatpush1.bf16.msra.mxu0 %v1092
          %1126 = vmatprep.subr.bf16.mxu0 0
          %1127 = vmatpush1.bf16.msra.mxu0 %v1093
          %1128 = vmatprep.subr.bf16.mxu0 0
          %1129 = vmatpush1.bf16.msra.mxu0 %v1094
          %1130 = vmatprep.subr.bf16.mxu0 0
          %1131 = vmatpush1.bf16.msra.mxu0 %v1095
          %1132 = vmatprep.subr.bf16.mxu0 0
          %1133 = vmatpush1.bf16.msra.mxu0 %v1096
          %1134 = vmatprep.subr.bf16.mxu0 0
          %1135 = vmatpush1.bf16.msra.mxu0 %v1097
          %1136 = vmatprep.subr.bf16.mxu0 0
          %1137 = vmatpush1.bf16.msra.mxu0 %v1098
          %1138 = vmatprep.subr.bf16.mxu0 0
          %1139 = vmatpush1.bf16.msra.mxu0 %v1099
          %1140 = vmatprep.subr.bf16.mxu0 0
          %1141 = vmatpush1.bf16.msra.mxu0 %v1100
          %1142 = vmatprep.subr.bf16.mxu0 0
          %1143 = vmatpush1.bf16.msra.mxu0 %v1101
          %1144 = vmatprep.subr.bf16.mxu0 0
          %1145 = vmatpush1.bf16.msra.mxu0 %v1102
          %1146 = vmatprep.subr.bf16.mxu0 0
          %1147 = vmatpush1.bf16.msra.mxu0 %v1103
          %1148 = vmatprep.subr.bf16.mxu0 0
          %1149 = vmatpush1.bf16.msra.mxu0 %v1104
          %1150 = vmatprep.subr.bf16.mxu0 0
          %1151 = vmatpush1.bf16.msra.mxu0 %v1105
          %1152 = vmatprep.subr.bf16.mxu0 0
          %1153 = vmatpush1.bf16.msra.mxu0 %v1106
          %1154 = vmatprep.subr.bf16.mxu0 0
          %1155 = vmatpush1.bf16.msra.mxu0 %v1107
          %1156 = vmatprep.mubr.bf16.mxu0 %v958
          %1157 = vmatmul.mubr.bf16.gmra.mrb[0].mxu0 %v957
          %v1158 = vpop.f32.mrb[0].mxu0
          %v1159 = vadd.f32 %v1026, %v1158
          %v1160 = vpop.f32.mrb[0].mxu0
          %v1161 = vpop.f32.mrb[0].mxu0
          %v1162 = vadd.f32 %v1026, %v1161
          %v1163 = vpop.f32.mrb[0].mxu0
          %1164 = vmatprep.mubr.bf16.mxu0 %v960
          %1165 = vmatmul.mubr.bf16.gmra.mrb[0].mxu0 %v959
          %v1166 = vpop.f32.mrb[0].mxu0
          %v1167 = vadd.f32 %v1026, %v1166
          %v1168 = vpop.f32.mrb[0].mxu0
          %v1169 = vpop.f32.mrb[0].mxu0
          %v1170 = vadd.f32 %v1026, %v1169
          %v1171 = vpop.f32.mrb[0].mxu0
          %1172 = vmatprep.mubr.bf16.mxu0 %v962
          %1173 = vmatmul.mubr.bf16.gmra.mrb[0].mxu0 %v961
          %v1174 = vpop.f32.mrb[0].mxu0
          %v1175 = vadd.f32 %v1026, %v1174
          %v1176 = vpop.f32.mrb[0].mxu0
          %v1177 = vpop.f32.mrb[0].mxu0
          %v1178 = vadd.f32 %v1026, %v1177
          %v1179 = vpop.f32.mrb[0].mxu0
          %1180 = vmatprep.mubr.bf16.mxu0 %v964
          %1181 = vmatmul.mubr.bf16.gmra.mrb[0].mxu0 %v963
          %v1182 = vpop.f32.mrb[0].mxu0
          %v1183 = vadd.f32 %v1026, %v1182
          %v1184 = vpop.f32.mrb[0].mxu0
          %v1185 = vpop.f32.mrb[0].mxu0
          %v1186 = vadd.f32 %v1026, %v1185
          %v1187 = vpop.f32.mrb[0].mxu0
          %1188 = vmatprep.mubr.bf16.mxu0 %v966
          %1189 = vmatmul.mubr.bf16.gmra.mrb[0].mxu0 %v965
          %v1190 = vpop.f32.mrb[0].mxu0
          %v1191 = vadd.f32 %v1026, %v1190
          %v1192 = vpop.f32.mrb[0].mxu0
          %v1193 = vpop.f32.mrb[0].mxu0
          %v1194 = vadd.f32 %v1026, %v1193
          %v1195 = vpop.f32.mrb[0].mxu0
          %1196 = vmatprep.mubr.bf16.mxu0 %v968
          %1197 = vmatmul.mubr.bf16.gmra.mrb[0].mxu0 %v967
          %v1198 = vpop.f32.mrb[0].mxu0
          %v1199 = vadd.f32 %v1026, %v1198
          %v1200 = vpop.f32.mrb[0].mxu0
          %v1201 = vpop.f32.mrb[0].mxu0
          %v1202 = vadd.f32 %v1026, %v1201
          %v1203 = vpop.f32.mrb[0].mxu0
          %1204 = vmatprep.mubr.bf16.mxu0 %v970
          %1205 = vmatmul.mubr.bf16.gmra.mrb[0].mxu0 %v969
          %v1206 = vpop.f32.mrb[0].mxu0
          %v1207 = vadd.f32 %v1026, %v1206
          %v1208 = vpop.f32.mrb[0].mxu0
          %v1209 = vpop.f32.mrb[0].mxu0
          %v1210 = vadd.f32 %v1026, %v1209
          %v1211 = vpop.f32.mrb[0].mxu0
          %1212 = vmatprep.mubr.bf16.mxu0 %v972
          %1213 = vmatmul.mubr.bf16.gmra.mrb[0].mxu0 %v971
          %v1214 = vpop.f32.mrb[0].mxu0
          %v1215 = vadd.f32 %v1026, %v1214
          %v1216 = vpop.f32.mrb[0].mxu0
          %v1217 = vpop.f32.mrb[0].mxu0
          %v1218 = vadd.f32 %v1026, %v1217
          %v1219 = vpop.f32.mrb[0].mxu0
          %1220 = vmatprep.mubr.bf16.mxu0 %v974
          %1221 = vmatmul.mubr.bf16.gmra.mrb[0].mxu0 %v973
          %v1222 = vpop.f32.mrb[0].mxu0
          %v1223 = vadd.f32 %v1026, %v1222
          %v1224 = vpop.f32.mrb[0].mxu0
          %v1225 = vpop.f32.mrb[0].mxu0
          %v1226 = vadd.f32 %v1026, %v1225
          %v1227 = vpop.f32.mrb[0].mxu0
          %1228 = vmatprep.mubr.bf16.mxu0 %v976
          %1229 = vmatmul.mubr.bf16.gmra.mrb[0].mxu0 %v975
          %v1230 = vpop.f32.mrb[0].mxu0
          %v1231 = vadd.f32 %v1026, %v1230
          %v1232 = vpop.f32.mrb[0].mxu0
          %v1233 = vpop.f32.mrb[0].mxu0
          %v1234 = vadd.f32 %v1026, %v1233
          %v1235 = vpop.f32.mrb[0].mxu0
          %1236 = vmatprep.mubr.bf16.mxu0 %v978
          %1237 = vmatmul.mubr.bf16.gmra.mrb[0].mxu0 %v977
          %v1238 = vpop.f32.mrb[0].mxu0
          %v1239 = vadd.f32 %v1026, %v1238
          %v1240 = vpop.f32.mrb[0].mxu0
          %v1241 = vpop.f32.mrb[0].mxu0
          %v1242 = vadd.f32 %v1026, %v1241
          %v1243 = vpop.f32.mrb[0].mxu0
          %1244 = vmatprep.mubr.bf16.mxu0 %v980
          %1245 = vmatmul.mubr.bf16.gmra.mrb[0].mxu0 %v979
          %v1246 = vpop.f32.mrb[0].mxu0
          %v1247 = vadd.f32 %v1026, %v1246
          %v1248 = vpop.f32.mrb[0].mxu0
          %v1249 = vpop.f32.mrb[0].mxu0
          %v1250 = vadd.f32 %v1026, %v1249
          %v1251 = vpop.f32.mrb[0].mxu0
          %1252 = vmatprep.mubr.bf16.mxu0 %v982
          %1253 = vmatmul.mubr.bf16.gmra.mrb[0].mxu0 %v981
          %v1254 = vpop.f32.mrb[0].mxu0
          %v1255 = vadd.f32 %v1026, %v1254
          %v1256 = vpop.f32.mrb[0].mxu0
          %v1257 = vpop.f32.mrb[0].mxu0
          %v1258 = vadd.f32 %v1026, %v1257
          %v1259 = vpop.f32.mrb[0].mxu0
          %1260 = vmatprep.mubr.bf16.mxu0 %v984
          %1261 = vmatmul.mubr.bf16.gmra.mrb[0].mxu0 %v983
          %v1262 = vpop.f32.mrb[0].mxu0
          %v1263 = vadd.f32 %v1026, %v1262
          %v1264 = vpop.f32.mrb[0].mxu0
          %v1265 = vpop.f32.mrb[0].mxu0
          %v1266 = vadd.f32 %v1026, %v1265
          %v1267 = vpop.f32.mrb[0].mxu0
          %1268 = vmatprep.mubr.bf16.mxu0 %v986
          %1269 = vmatmul.mubr.bf16.gmra.mrb[0].mxu0 %v985
          %v1270 = vpop.f32.mrb[0].mxu0
          %v1271 = vadd.f32 %v1026, %v1270
          %v1272 = vpop.f32.mrb[0].mxu0
          %v1273 = vpop.f32.mrb[0].mxu0
          %v1274 = vadd.f32 %v1026, %v1273
          %v1275 = vpop.f32.mrb[0].mxu0
          %1276 = vmatprep.mubr.bf16.mxu0 %v988
          %1277 = vmatmul.mubr.bf16.gmra.mrb[0].mxu0 %v987
          %v1278 = vpop.f32.mrb[0].mxu0
          %v1279 = vadd.f32 %v1026, %v1278
          %v1280 = vpop.f32.mrb[0].mxu0
          %v1281 = vpop.f32.mrb[0].mxu0
          %v1282 = vadd.f32 %v1026, %v1281
          %v1283 = vpop.f32.mrb[0].mxu0
          %1284 = vdwg.mxu0
          %v1285 = vmax.f32 %v1159, 0.0
          %v1286 = vmax.f32 %v1162, 0.0
          %v1287 = vmax.f32 %v1167, 0.0
          %v1288 = vmax.f32 %v1170, 0.0
          %v1289 = vmax.f32 %v1175, 0.0
          %v1290 = vmax.f32 %v1178, 0.0
          %v1291 = vmax.f32 %v1183, 0.0
          %v1292 = vmax.f32 %v1186, 0.0
          %v1293 = vmax.f32 %v1191, 0.0
          %v1294 = vmax.f32 %v1194, 0.0
          %v1295 = vmax.f32 %v1199, 0.0
          %v1296 = vmax.f32 %v1202, 0.0
          %v1297 = vmax.f32 %v1207, 0.0
          %v1298 = vmax.f32 %v1210, 0.0
          %v1299 = vmax.f32 %v1215, 0.0
          %v1300 = vmax.f32 %v1218, 0.0
          %v1301 = vmax.f32 %v1223, 0.0
          %v1302 = vmax.f32 %v1226, 0.0
          %v1303 = vmax.f32 %v1231, 0.0
          %v1304 = vmax.f32 %v1234, 0.0
          %v1305 = vmax.f32 %v1239, 0.0
          %v1306 = vmax.f32 %v1242, 0.0
          %v1307 = vmax.f32 %v1247, 0.0
          %v1308 = vmax.f32 %v1250, 0.0
          %v1309 = vmax.f32 %v1255, 0.0
          %v1310 = vmax.f32 %v1258, 0.0
          %v1311 = vmax.f32 %v1263, 0.0
          %v1312 = vmax.f32 %v1266, 0.0
          %v1313 = vmax.f32 %v1271, 0.0
          %v1314 = vmax.f32 %v1274, 0.0
          %v1315 = vmax.f32 %v1279, 0.0
          %v1316 = vmax.f32 %v1282, 0.0
          %1317 = vst [vmem:[%s433] sm:$0xff] %v1285
          %1318 = vst [vmem:[%s433 + $0x8] sm:$0xff] %v1286
          %1319 = vst [vmem:[%s433 + $0x10] sm:$0xff] %v1287
          %1320 = vst [vmem:[%s433 + $0x18] sm:$0xff] %v1288
          %1321 = vst [vmem:[%s433 + $0x20] sm:$0xff] %v1289
          %1322 = vst [vmem:[%s433 + $0x28] sm:$0xff] %v1290
          %1323 = vst [vmem:[%s433 + $0x30] sm:$0xff] %v1291
          %1324 = vst [vmem:[%s433 + $0x38] sm:$0xff] %v1292
          %1325 = vst [vmem:[%s433 + $0x40] sm:$0xff] %v1293
          %1326 = vst [vmem:[%s433 + $0x48] sm:$0xff] %v1294
          %1327 = vst [vmem:[%s433 + $0x50] sm:$0xff] %v1295
          %1328 = vst [vmem:[%s433 + $0x58] sm:$0xff] %v1296
          %1329 = vst [vmem:[%s433 + $0x60] sm:$0xff] %v1297
          %1330 = vst [vmem:[%s433 + $0x68] sm:$0xff] %v1298
          %1331 = vst [vmem:[%s433 + $0x70] sm:$0xff] %v1299
          %1332 = vst [vmem:[%s433 + $0x78] sm:$0xff] %v1300
          %1333 = vst [vmem:[%s433 + $0x80] sm:$0xff] %v1301
          %1334 = vst [vmem:[%s433 + $0x88] sm:$0xff] %v1302
          %1335 = vst [vmem:[%s433 + $0x90] sm:$0xff] %v1303
          %1336 = vst [vmem:[%s433 + $0x98] sm:$0xff] %v1304
          %1337 = vst [vmem:[%s433 + $0xa0] sm:$0xff] %v1305
          %1338 = vst [vmem:[%s433 + $0xa8] sm:$0xff] %v1306
          %1339 = vst [vmem:[%s433 + $0xb0] sm:$0xff] %v1307
          %1340 = vst [vmem:[%s433 + $0xb8] sm:$0xff] %v1308
          %1341 = vst [vmem:[%s433 + $0xc0] sm:$0xff] %v1309
          %1342 = vst [vmem:[%s433 + $0xc8] sm:$0xff] %v1310
          %1343 = vst [vmem:[%s433 + $0xd0] sm:$0xff] %v1311
          %1344 = vst [vmem:[%s433 + $0xd8] sm:$0xff] %v1312
          %1345 = vst [vmem:[%s433 + $0xe0] sm:$0xff] %v1313
          %1346 = vst [vmem:[%s433 + $0xe8] sm:$0xff] %v1314
          %1347 = vst [vmem:[%s433 + $0xf0] sm:$0xff] %v1315
          %1348 = vst [vmem:[%s433 + $0xf8] sm:$0xff] %v1316
        $region71: #{graphsage0tpk_forward.4} parent=58 // pred_fallthru
          _
        %s1349 = smul.u32 32, %s20
        %p1350 = scmp.lt.s32.totalorder %s1349, 63
        %s1351 = scalar_select %p1350, %s1349, 63
        %s1352 = smul.addr %s1351, 8
        %s1353 = scalar_lea.vmem %s5, %s1352
        // Predicated region
        $region72: #{graphsage0tpk_forward.4} parent=58 // pred_check
          %p1354 = pneg %p168
        $region73: #{graphsage0tpk_forward.4} parent=58 // pred_check_branch
          %1356 = sbr.rel (%p1354) target = $region75
        $region74: #{graphsage0tpk_forward.4} parent=58 // pred_region
          %s1357 = smul.u32 32, %s20
        $region75: #{graphsage0tpk_forward.4} parent=58 // pred_fallthru
          _
      $region59: #{graphsage0tpk_forward.4} parent=5 // pred_fallthru
        _
      %p1358 = scmp.le.s32.totalorder 2, %s11
      // Predicated region
      $region76: #{graphsage0tpk_forward.4} parent=5 // pred_check
        %p1359 = pneg %p1358
      $region77: #{graphsage0tpk_forward.4} parent=5 // pred_check_branch
        %1361 = sbr.rel (%p1359) target = $region79
      $region78: #{graphsage0tpk_forward.4} parent=5 // pred_region
        %s1362 = ssub.s32 %s11, 2
        // Predicated region
        $region80: #{graphsage0tpk_forward.4} parent=78 // pred_check
          %p1363 = pneg %p174
        $region81: #{graphsage0tpk_forward.4} parent=78 // pred_check_branch
          %1365 = sbr.rel (%p1363) target = $region83
        $region82: #{graphsage0tpk_forward.4} parent=78 // pred_region
          %s1366 = smul.u32 32, %s22
          %p1367 = scmp.lt.s32.totalorder %s1366, 63
          %s1368 = scalar_select %p1367, %s1366, 63
          %s1369 = smul.addr %s1368, 8
          %s1370 = scalar_lea.vmem %s5, %s1369
        $region83: #{graphsage0tpk_forward.4} parent=78 // pred_fallthru
          _
      $region79: #{graphsage0tpk_forward.4} parent=5 // pred_fallthru
        _
    $region6: #{graphsage0tpk_forward.4} parent=1 // loop_footer
      %s15 = sadd.s32 1, %s11
    $region7: #{graphsage0tpk_forward.4} parent=1 // loop_footer_branch
      %10 = sbr.rel target = $region3
    $region8: #{graphsage0tpk_forward.4} parent=1 // loop_exit
      _

</llo_original>
